<compile_context>
chip_gen: v5e
topology: v5e:2x2
jax: 0.10.0
libtpu: 0.0.40
codegen_flags: <defaults>
</compile_context>

<pallas_src>
import math
from functools import partial

import jax
import jax.numpy as jnp
from jax import lax
from jax.experimental import pallas as pl
from jax.experimental.pallas import tpu as pltpu

_NEG_INF = -1e30        # big finite negative: masked softmax rows stay NaN-free


# --------------------------- feature / hardware probes ------------------------

def _probe_single_buffer():
    # pipeline_mode=pl.Buffered(1) keeps grid-invariant weights as a single
    # resident VMEM copy instead of a useless double buffer.
    try:
        pl.BlockSpec((8, 128), lambda i: (0, 0), pipeline_mode=pl.Buffered(1))
        return True
    except Exception:
        return False


_HAS_SINGLE_BUFFER = _probe_single_buffer()


def _vmem_limit_bytes():
    # ~7/8 of physical VMEM: ~112 MB on v5e/v6e (128 MiB), ~56 MB on v7x
    # (64 MiB per TensorCore).  Conservative v7x-safe default if the query is
    # unavailable in this jax build.
    try:
        cap = int(pltpu.get_tpu_info().vmem_capacity_bytes)
    except Exception:
        cap = 64 * 1024 * 1024
    return min(cap * 7 // 8, 112 * 1024 * 1024)


# ----------------------------- in-kernel helpers ------------------------------

def _layer_norm_f32(x, g, b, eps=1e-5):
    mu = jnp.mean(x, axis=-1, keepdims=True)
    var = jnp.mean((x - mu) ** 2, axis=-1, keepdims=True)
    return (x - mu) * lax.rsqrt(var + eps) * g + b


def _gelu_tanh(x):
    c = math.sqrt(2.0 / math.pi)
    return 0.5 * x * (1.0 + jnp.tanh(c * (x + 0.044715 * x * x * x)))


# ------------------------- kernel 1: ln_1 + QKV proj --------------------------

def qkv_kernel(n_head, x_ref, ln1g_ref, ln1b_ref, wqkv_ref, bqkv_ref,
               q_ref, k_ref, v_ref):
    C = x_ref.shape[-1]
    hd = C // n_head
    scale = 1.0 / math.sqrt(hd)

    x = x_ref[0].astype(jnp.float32)                                # (TQ, C)
    h = _layer_norm_f32(x, ln1g_ref[...].astype(jnp.float32),
                        ln1b_ref[...].astype(jnp.float32))
    h = h.astype(wqkv_ref.dtype)
    qkv = (jnp.dot(h, wqkv_ref[...], preferred_element_type=jnp.float32)
           + bqkv_ref[...].astype(jnp.float32))                     # (TQ, 3C)

    # Lane-dense (TQ, C) slabs: three full-width stores, no masked per-head
    # stores and no lane padding of the kernel1 -> kernel2 HBM round trip.
    q_ref[0] = (qkv[:, 0 * C:1 * C] * scale).astype(q_ref.dtype)
    k_ref[0] = qkv[:, 1 * C:2 * C].astype(k_ref.dtype)
    v_ref[0] = qkv[:, 2 * C:3 * C].astype(v_ref.dtype)


# ---------- kernel 2: flash attention + c_proj + residual + ln_2 + MLP --------

def attn_mlp_kernel(n_head, eup_dtype,
                    qtab_ref, kvtab_ref,
                    x_ref, q_ref, k_ref, v_ref,
                    wap_ref, bap_ref, ln2g_ref, ln2b_ref,
                    wfc_ref, bfc_ref, wmp_ref, bmp_ref,
                    o_ref,
                    m_sc, l_sc, acc_sc, qh_sc):
    step = pl.program_id(1)
    qi = qtab_ref[step]          # q-tile index for this step
    kv = kvtab_ref[step]         # kv-tile index (kv <= qi by construction)

    H = n_head
    TQ = q_ref.shape[1]
    TK = k_ref.shape[1]
    C = q_ref.shape[2]
    hd = C // H

    @pl.when(kv == 0)
    def _init():
        m_sc[...] = jnp.full(m_sc.shape, _NEG_INF, m_sc.dtype)
        l_sc[...] = jnp.zeros(l_sc.shape, l_sc.dtype)
        acc_sc[...] = jnp.zeros(acc_sc.shape, acc_sc.dtype)
        # Head split of q once per q row (it is constant across the kv steps).
        qh_sc[...] = jnp.transpose(q_ref[0].reshape(TQ, H, hd), (1, 0, 2))

    # Head split of the lane-dense K/V slabs happens here on VMEM-resident data
    # (XLU relayout) instead of as masked 64-lane HBM stores in kernel 1.
    kh = jnp.transpose(k_ref[0].reshape(TK, H, hd), (1, 0, 2))      # (H, TK, hd)
    vh = jnp.transpose(v_ref[0].reshape(TK, H, hd), (1, 0, 2))      # (H, TK, hd)
    qh = qh_sc[...]                                                  # (H, TQ, hd)

    # One head-batched MXU matmul (q already carries 1/sqrt(hd)).
    s = jnp.einsum("hqd,hkd->hqk", qh, kh, preferred_element_type=jnp.float32)

    # Causal mask only matters on the diagonal tile (Q and KV share tile size).
    row = lax.broadcasted_iota(jnp.int32, (TQ, TK), 0)
    col = lax.broadcasted_iota(jnp.int32, (TQ, TK), 1)
    mask = jnp.logical_and(kv == qi, col > row)
    s = jnp.where(mask[None, :, :], _NEG_INF, s)

    # Online (flash) softmax.  Stats stay f32; the bulk exp runs in eup_dtype
    # (bf16 on v6e/v7x roughly halves the dominant EUP cost of the inner loop).
    # TODO(synk): m_sc/l_sc keep 1 element per 128-lane vreg; widen only if the
    # bundle dump shows VPU/XLU as the binding slot.
    m_prev = m_sc[...]
    m_new = jnp.maximum(m_prev, jnp.max(s, axis=-1, keepdims=True))
    alpha = jnp.exp(m_prev - m_new)                                  # f32, tiny
    p = jnp.exp((s - m_new).astype(eup_dtype))
    l_sc[...] = alpha * l_sc[...] + jnp.sum(p.astype(jnp.float32), axis=-1,
                                            keepdims=True)
    acc_sc[...] = alpha * acc_sc[...] + jnp.einsum(
        "hqk,hkd->hqd", p.astype(vh.dtype), vh,
        preferred_element_type=jnp.float32)
    m_sc[...] = m_new

    # Epilogue on the diagonal tile == last step of this q row.
    @pl.when(kv == qi)
    def _epilogue():
        inv_l = pl.reciprocal(l_sc[...], approx=True)                # EUP, ~free
        att = (acc_sc[...] * inv_l).astype(wap_ref.dtype)            # (H, TQ, hd)
        # Contract heads directly against the (H, hd, C) attention projection:
        # lane-dense (TQ, C) result, no per-head assembly scratch.
        y = jnp.einsum("hqd,hdc->qc", att, wap_ref[...],
                       preferred_element_type=jnp.float32)
        y = y + bap_ref[...].astype(jnp.float32)
        x1 = x_ref[0].astype(jnp.float32) + y                        # residual 1

        # TODO(synk): for GPT-2 medium/large (or f32 weights on v7x) tile the
        # 4C hidden axis of the MLP so wfc/wmp need not be fully VMEM-resident.
        h2 = _layer_norm_f32(x1, ln2g_ref[...].astype(jnp.float32),
                             ln2b_ref[...].astype(jnp.float32))
        h2 = (jnp.dot(h2.astype(wfc_ref.dtype), wfc_ref[...],
                      preferred_element_type=jnp.float32)
              + bfc_ref[...].astype(jnp.float32))
        h2 = _gelu_tanh(h2.astype(eup_dtype))                        # bf16 EUP path
        h2 = (jnp.dot(h2.astype(wmp_ref.dtype), wmp_ref[...],
                      preferred_element_type=jnp.float32)
              + bmp_ref[...].astype(jnp.float32))

        o_ref[0] = (x1 + h2).astype(o_ref.dtype)                     # residual 2


# ---------------------------------- wrapper ------------------------------------

def _pick_seq_tile(T, big_ok=True):
    # 512 keeps the mem-bound parts near the HBM roofline (v6e: 256->512 block
    # is 63%->85% of roofline).  Cap at 256 when weights are double-buffered so
    # the fallback configuration still fits v7x's 64 MiB per-core VMEM.
    prefs = (512, 256, 128) if big_ok else (256, 128)
    for cand in prefs:
        if T % cand == 0:
            return cand
    return T


def gpt2_block(x, params, n_head, *, seq_tile=None, single_buffer_weights=None,
               eup_dtype=None, qkv_dtype=None, kv_buffers=2):
    (ln1g, ln1b, wqkv, bqkv, wap, bap, ln2g, ln2b, wfc, bfc, wmp, bmp) = params
    B, T, C = x.shape
    assert C % n_head == 0
    H = n_head
    hd = C // H

    if single_buffer_weights is None:
        single_buffer_weights = _HAS_SINGLE_BUFFER
    single_buffer_weights = bool(single_buffer_weights and _HAS_SINGLE_BUFFER)

    if seq_tile is None:
        seq_tile = _pick_seq_tile(T, big_ok=single_buffer_weights)
    tq = seq_tile
    assert T % tq == 0
    nT = T // tq

    if eup_dtype is None:
        # bf16 exp / GELU on the bf16 activation path (v6e/v7x bf16 EUP);
        # full f32 transcendental math when activations are f32.
        eup_dtype = jnp.bfloat16 if x.dtype == jnp.bfloat16 else jnp.float32
    if qkv_dtype is None:
        # TODO(synk): on v7x consider bf16 here even for f32 x to halve the
        # kernel1 -> kernel2 HBM round trip.
        qkv_dtype = x.dtype

    vmem_limit = _vmem_limit_bytes()
    wkw = dict(pipeline_mode=pl.Buffered(1)) if single_buffer_weights else {}
    kvkw = (dict(pipeline_mode=pl.Buffered(kv_buffers))
            if (_HAS_SINGLE_BUFFER and kv_buffers != 2) else {})

    # ---- kernel 1: ln_1 + fused QKV projection ----
    def w1(shape):
        z = (0,) * len(shape)
        return pl.BlockSpec(shape, lambda b, i, _z=z: _z, **wkw)

    q, k, v = pl.pallas_call(
        partial(qkv_kernel, H),
        out_shape=tuple(jax.ShapeDtypeStruct((B, T, C), qkv_dtype)
                        for _ in range(3)),
        grid=(B, nT),
        in_specs=[
            pl.BlockSpec((1, tq, C), lambda b, i: (b, i, 0)),
            w1((1, C)), w1((1, C)),
            w1((C, 3 * C)), w1((1, 3 * C)),
        ],
        out_specs=tuple(pl.BlockSpec((1, tq, C), lambda b, i: (b, i, 0))
                        for _ in range(3)),
        compiler_params=pltpu.CompilerParams(
            dimension_semantics=("parallel", "parallel"),
            vmem_limit_bytes=vmem_limit),
    )(x, ln1g, ln1b, wqkv, bqkv)

    # ---- kernel 2: flash attention + c_proj + residual + ln_2 + MLP + residual ----
    # Flattened lower-triangle step -> (q tile, kv tile) table: every grid step
    # does real attention work (no wasted upper-triangle steps).
    q_tab, kv_tab = [], []
    for qi in range(nT):
        for kvi in range(qi + 1):
            q_tab.append(qi)
            kv_tab.append(kvi)
    q_tab = jnp.asarray(q_tab, dtype=jnp.int32)
    kv_tab = jnp.asarray(kv_tab, dtype=jnp.int32)
    n_steps = int(q_tab.shape[0])

    wap_r = wap.reshape(H, hd, C)   # head-major c_proj for the epilogue einsum

    def w2(shape):
        z = (0,) * len(shape)
        return pl.BlockSpec(shape, lambda b, s, qt, kt, _z=z: _z, **wkw)

    x_spec = pl.BlockSpec((1, tq, C), lambda b, s, qt, kt: (b, qt[s], 0))
    q_spec = pl.BlockSpec((1, tq, C), lambda b, s, qt, kt: (b, qt[s], 0))

    def kv_spec():
        return pl.BlockSpec((1, tq, C), lambda b, s, qt, kt: (b, kt[s], 0), **kvkw)

    out = pl.pallas_call(
        partial(attn_mlp_kernel, H, eup_dtype),
        out_shape=jax.ShapeDtypeStruct((B, T, C), x.dtype),
        grid_spec=pltpu.PrefetchScalarGridSpec(
            num_scalar_prefetch=2,
            grid=(B, n_steps),
            in_specs=[
                x_spec, q_spec, kv_spec(), kv_spec(),
                w2((H, hd, C)), w2((1, C)),          # attn c_proj (head-major), bias
                w2((1, C)), w2((1, C)),              # ln_2 gamma, beta
                w2((C, 4 * C)), w2((1, 4 * C)),      # mlp c_fc W, b
                w2((4 * C, C)), w2((1, C)),          # mlp c_proj W, b
            ],
            out_specs=pl.BlockSpec((1, tq, C), lambda b, s, qt, kt: (b, qt[s], 0)),
            scratch_shapes=[
                pltpu.VMEM((H, tq, 1), jnp.float32),     # running max
                pltpu.VMEM((H, tq, 1), jnp.float32),     # running denominator
                pltpu.VMEM((H, tq, hd), jnp.float32),    # running numerator
                pltpu.VMEM((H, tq, hd), qkv_dtype),      # head-split q cache
            ],
        ),
        # Batch axis stays "parallel" for v7x megacore balance; the flattened
        # step axis must be "arbitrary" (sequential accumulator).
        compiler_params=pltpu.CompilerParams(
            dimension_semantics=("parallel", "arbitrary"),
            vmem_limit_bytes=vmem_limit),
    )(q_tab, kv_tab, x, q, k, v, wap_r, bap, ln2g, ln2b, wfc, bfc, wmp, bmp)
    return out


# ------------------------------ pure-JAX reference -----------------------------

def gpt2_block_ref(x, params, n_head):
    (ln1g, ln1b, wqkv, bqkv, wap, bap, ln2g, ln2b, wfc, bfc, wmp, bmp) = params
    B, T, C = x.shape
    hd = C // n_head

    def ln(z, g, b, eps=1e-5):
        mu = z.mean(-1, keepdims=True)
        var = ((z - mu) ** 2).mean(-1, keepdims=True)
        return (z - mu) / jnp.sqrt(var + eps) * g + b

    h = ln(x, ln1g[0], ln1b[0])
    qkv = h @ wqkv + bqkv[0]
    q, k, v = jnp.split(qkv, 3, axis=-1)
    q = q.reshape(B, T, n_head, hd).transpose(0, 2, 1, 3)
    k = k.reshape(B, T, n_head, hd).transpose(0, 2, 1, 3)
    v = v.reshape(B, T, n_head, hd).transpose(0, 2, 1, 3)
    s = jnp.einsum("bhtd,bhsd->bhts", q, k) / math.sqrt(hd)
    mask = jnp.tril(jnp.ones((T, T), bool))
    s = jnp.where(mask, s, -jnp.inf)
    p = jax.nn.softmax(s, axis=-1)
    y = jnp.einsum("bhts,bhsd->bhtd", p, v).transpose(0, 2, 1, 3).reshape(B, T, C)
    y = y @ wap + bap[0]
    x = x + y

    h2 = ln(x, ln2g[0], ln2b[0])
    h2 = h2 @ wfc + bfc[0]
    h2 = 0.5 * h2 * (1.0 + jnp.tanh(math.sqrt(2.0 / math.pi) * (h2 + 0.044715 * h2 ** 3)))
    h2 = h2 @ wmp + bmp[0]
    return x + h2


# ------------------------------------ main --------------------------------------

if __name__ == "__main__":
    B, T, C, n_head = 2, 64, 128, 4

    key = jax.random.PRNGKey(0)
    ks = jax.random.split(key, 10)

    x = jax.random.normal(ks[0], (B, T, C), jnp.float32)

    params = (
        1.0 + 0.1 * jax.random.normal(ks[1], (1, C), jnp.float32),   # ln_1 gamma
        0.1 * jax.random.normal(ks[2], (1, C), jnp.float32),         # ln_1 beta
        0.02 * jax.random.normal(ks[3], (C, 3 * C), jnp.float32),    # c_attn W
        0.01 * jax.random.normal(ks[4], (1, 3 * C), jnp.float32),    # c_attn b
        0.02 * jax.random.normal(ks[5], (C, C), jnp.float32),        # attn c_proj W
        jnp.zeros((1, C), jnp.float32),                              # attn c_proj b
        jnp.ones((1, C), jnp.float32),                               # ln_2 gamma
        jnp.zeros((1, C), jnp.float32),                              # ln_2 beta
        0.02 * jax.random.normal(ks[6], (C, 4 * C), jnp.float32),    # c_fc W
        0.01 * jax.random.normal(ks[7], (1, 4 * C), jnp.float32),    # c_fc b
        0.02 * jax.random.normal(ks[8], (4 * C, C), jnp.float32),    # mlp c_proj W
        jnp.zeros((1, C), jnp.float32),                              # mlp c_proj b
    )

    def run(x_, params_, seq_tile):
        try:
            o = gpt2_block(x_, params_, n_head, seq_tile=seq_tile)
        except Exception:
            # Last-resort robustness: Pallas builds where pl.Buffered(1) parses
            # but fails to lower.  At these demo shapes the default
            # double-buffered weights are well inside VMEM.
            o = gpt2_block(x_, params_, n_head, seq_tile=seq_tile,
                           single_buffer_weights=False)
        return jax.block_until_ready(o)

    ref = gpt2_block_ref(x, params, n_head)

    # f32 path: 4 sequence tiles -> exercises the flattened lower-triangle flash
    # pipeline, init/epilogue gating, and the fused c_proj + ln_2 + MLP epilogue.
    out = run(x, params, seq_tile=16)
    assert out.shape == (B, T, C) and out.dtype == x.dtype
    err = float(jnp.max(jnp.abs(out - ref)))
    # approx reciprocal adds ~2^-12 relative error on top of f32 MXU rounding.
    assert bool(jnp.allclose(out, ref, rtol=1e-3, atol=1e-3)), err

    # bf16 path: bf16 MXU operands + bf16 exp/GELU (EUP) -> loose check vs f32 ref.
    out_bf = run(x.astype(jnp.bfloat16),
                 tuple(p.astype(jnp.bfloat16) for p in params), seq_tile=16)
    err_bf = float(jnp.max(jnp.abs(out_bf.astype(jnp.float32) - ref)))
    assert bool(jnp.allclose(out_bf.astype(jnp.float32), ref,
                             rtol=5e-2, atol=1e-1)), err_bf

    print("KERNEL_OK")
</pallas_src>

<mosaic_0001>
module attributes {stable_mosaic.version = 11 : i64} {
  func.func @qkv_kernel(%arg0: i32, %arg1: i32, %arg2: memref<1x16x128xf32, #tpu.memory_space<vmem>>, %arg3: memref<1x128xf32, #tpu.memory_space<vmem>>, %arg4: memref<1x128xf32, #tpu.memory_space<vmem>>, %arg5: memref<128x384xf32, #tpu.memory_space<vmem>>, %arg6: memref<1x384xf32, #tpu.memory_space<vmem>>, %arg7: memref<1x16x128xf32, #tpu.memory_space<vmem>>, %arg8: memref<1x16x128xf32, #tpu.memory_space<vmem>>, %arg9: memref<1x16x128xf32, #tpu.memory_space<vmem>>) attributes {dimension_semantics = [#tpu.dimension_semantics<parallel>, #tpu.dimension_semantics<parallel>], iteration_bounds = array<i64: 2, 4>, scalar_prefetch = 0 : i64, scratch_operands = 0 : i64, tpu.core_type = #tpu.core_type<tc>, window_params = [{transform_indices = @transform_0, window_bounds = array<i64: 1, 16, 128>}, {pipeline_mode = #tpu.pipeline_mode<synchronous>, transform_indices = @transform_1, window_bounds = array<i64: 1, 128>}, {pipeline_mode = #tpu.pipeline_mode<synchronous>, transform_indices = @transform_2, window_bounds = array<i64: 1, 128>}, {pipeline_mode = #tpu.pipeline_mode<synchronous>, transform_indices = @transform_3, window_bounds = array<i64: 128, 384>}, {pipeline_mode = #tpu.pipeline_mode<synchronous>, transform_indices = @transform_4, window_bounds = array<i64: 1, 384>}, {transform_indices = @transform_5, window_bounds = array<i64: 1, 16, 128>}, {transform_indices = @transform_6, window_bounds = array<i64: 1, 16, 128>}, {transform_indices = @transform_7, window_bounds = array<i64: 1, 16, 128>}]} {
    %c0 = arith.constant 0 : index
    %c0_0 = arith.constant 0 : index
    %c0_1 = arith.constant 0 : index
    %0 = vector.load %arg2[%c0, %c0_0, %c0_1] : memref<1x16x128xf32, #tpu.memory_space<vmem>>, vector<1x16x128xf32>
    %1 = vector.shape_cast %0 : vector<1x16x128xf32> to vector<16x128xf32>
    %c0_2 = arith.constant 0 : index
    %c0_3 = arith.constant 0 : index
    %2 = vector.load %arg3[%c0_2, %c0_3] : memref<1x128xf32, #tpu.memory_space<vmem>>, vector<1x128xf32>
    %c0_4 = arith.constant 0 : index
    %c0_5 = arith.constant 0 : index
    %3 = vector.load %arg4[%c0_4, %c0_5] : memref<1x128xf32, #tpu.memory_space<vmem>>, vector<1x128xf32>
    %cst = arith.constant dense<0.000000e+00> : vector<16xf32>
    %4 = vector.multi_reduction <add>, %1, %cst [1] : vector<16x128xf32> to vector<16xf32>
    %5 = vector.shape_cast %4 : vector<16xf32> to vector<16x1xf32>
    %cst_6 = arith.constant 1.280000e+02 : f32
    %6 = vector.broadcast %cst_6 : f32 to vector<16x1xf32>
    %7 = arith.divf %5, %6 : vector<16x1xf32>
    %8 = vector.broadcast %7 : vector<16x1xf32> to vector<16x128xf32>
    %9 = arith.subf %1, %8 : vector<16x128xf32>
    %10 = arith.mulf %9, %9 : vector<16x128xf32>
    %cst_7 = arith.constant dense<0.000000e+00> : vector<16xf32>
    %11 = vector.multi_reduction <add>, %10, %cst_7 [1] : vector<16x128xf32> to vector<16xf32>
    %12 = vector.shape_cast %11 : vector<16xf32> to vector<16x1xf32>
    %cst_8 = arith.constant 1.280000e+02 : f32
    %13 = vector.broadcast %cst_8 : f32 to vector<16x1xf32>
    %14 = arith.divf %12, %13 : vector<16x1xf32>
    %15 = vector.broadcast %7 : vector<16x1xf32> to vector<16x128xf32>
    %16 = arith.subf %1, %15 : vector<16x128xf32>
    %cst_9 = arith.constant 9.99999974E-6 : f32
    %17 = vector.broadcast %cst_9 : f32 to vector<16x1xf32>
    %18 = arith.addf %14, %17 : vector<16x1xf32>
    %19 = math.rsqrt %18 : vector<16x1xf32>
    %20 = vector.broadcast %19 : vector<16x1xf32> to vector<16x128xf32>
    %21 = arith.mulf %16, %20 : vector<16x128xf32>
    %22 = vector.broadcast %2 : vector<1x128xf32> to vector<16x128xf32>
    %23 = arith.mulf %21, %22 : vector<16x128xf32>
    %24 = vector.broadcast %3 : vector<1x128xf32> to vector<16x128xf32>
    %25 = arith.addf %23, %24 : vector<16x128xf32>
    %c0_10 = arith.constant 0 : index
    %c0_11 = arith.constant 0 : index
    %26 = vector.load %arg5[%c0_10, %c0_11] : memref<128x384xf32, #tpu.memory_space<vmem>>, vector<128x384xf32>
    %cst_12 = arith.constant dense<0.000000e+00> : vector<16x384xf32>
    %27 = tpu.matmul %25, %26, %cst_12 {dimension_numbers = #tpu.dot_dimension_numbers<[1], [0], [0], [1], [0, 0, 1, 1], [], []>} : vector<16x128xf32>, vector<128x384xf32>, vector<16x384xf32> -> vector<16x384xf32>
    %c0_13 = arith.constant 0 : index
    %c0_14 = arith.constant 0 : index
    %28 = vector.load %arg6[%c0_13, %c0_14] : memref<1x384xf32, #tpu.memory_space<vmem>>, vector<1x384xf32>
    %29 = vector.broadcast %28 : vector<1x384xf32> to vector<16x384xf32>
    %30 = arith.addf %27, %29 : vector<16x384xf32>
    %31 = vector.extract_strided_slice %30 {offsets = [0, 0], sizes = [16, 128], strides = [1, 1]} : vector<16x384xf32> to vector<16x128xf32>
    %cst_15 = arith.constant 0.176776692 : f32
    %32 = vector.broadcast %cst_15 : f32 to vector<16x128xf32>
    %33 = arith.mulf %31, %32 : vector<16x128xf32>
    %c0_16 = arith.constant 0 : index
    %c0_17 = arith.constant 0 : index
    %c0_18 = arith.constant 0 : index
    %34 = vector.load %arg7[%c0_16, %c0_17, %c0_18] : memref<1x16x128xf32, #tpu.memory_space<vmem>>, vector<1x16x128xf32>
    %35 = vector.shape_cast %34 : vector<1x16x128xf32> to vector<16x128xf32>
    %36 = vector.shape_cast %33 : vector<16x128xf32> to vector<1x16x128xf32>
    tpu.vector_store %arg7[%c0_16, %c0_17, %c0_18], %36 {strides = array<i32>} : memref<1x16x128xf32, #tpu.memory_space<vmem>>, vector<1x16x128xf32>,
    %37 = vector.extract_strided_slice %30 {offsets = [0, 128], sizes = [16, 128], strides = [1, 1]} : vector<16x384xf32> to vector<16x128xf32>
    %c0_19 = arith.constant 0 : index
    %c0_20 = arith.constant 0 : index
    %c0_21 = arith.constant 0 : index
    %38 = vector.load %arg8[%c0_19, %c0_20, %c0_21] : memref<1x16x128xf32, #tpu.memory_space<vmem>>, vector<1x16x128xf32>
    %39 = vector.shape_cast %38 : vector<1x16x128xf32> to vector<16x128xf32>
    %40 = vector.shape_cast %37 : vector<16x128xf32> to vector<1x16x128xf32>
    tpu.vector_store %arg8[%c0_19, %c0_20, %c0_21], %40 {strides = array<i32>} : memref<1x16x128xf32, #tpu.memory_space<vmem>>, vector<1x16x128xf32>,
    %41 = vector.extract_strided_slice %30 {offsets = [0, 256], sizes = [16, 128], strides = [1, 1]} : vector<16x384xf32> to vector<16x128xf32>
    %c0_22 = arith.constant 0 : index
    %c0_23 = arith.constant 0 : index
    %c0_24 = arith.constant 0 : index
    %42 = vector.load %arg9[%c0_22, %c0_23, %c0_24] : memref<1x16x128xf32, #tpu.memory_space<vmem>>, vector<1x16x128xf32>
    %43 = vector.shape_cast %42 : vector<1x16x128xf32> to vector<16x128xf32>
    %44 = vector.shape_cast %41 : vector<16x128xf32> to vector<1x16x128xf32>
    tpu.vector_store %arg9[%c0_22, %c0_23, %c0_24], %44 {strides = array<i32>} : memref<1x16x128xf32, #tpu.memory_space<vmem>>, vector<1x16x128xf32>,
    return
  }
  func.func @transform_0(%arg0: i32, %arg1: i32) -> (i32, i32, i32) {
    %c0_i32 = arith.constant 0 : i32
    %c0_i32_0 = arith.constant 0 : i32
    return %arg0, %arg1, %c0_i32 : i32, i32, i32
  }
  func.func @transform_1(%arg0: i32, %arg1: i32) -> (i32, i32) {
    %c0_i32 = arith.constant 0 : i32
    %c0_i32_0 = arith.constant 0 : i32
    %c0_i32_1 = arith.constant 0 : i32
    return %c0_i32, %c0_i32_0 : i32, i32
  }
  func.func @transform_2(%arg0: i32, %arg1: i32) -> (i32, i32) {
    %c0_i32 = arith.constant 0 : i32
    %c0_i32_0 = arith.constant 0 : i32
    %c0_i32_1 = arith.constant 0 : i32
    return %c0_i32, %c0_i32_0 : i32, i32
  }
  func.func @transform_3(%arg0: i32, %arg1: i32) -> (i32, i32) {
    %c0_i32 = arith.constant 0 : i32
    %c0_i32_0 = arith.constant 0 : i32
    %c0_i32_1 = arith.constant 0 : i32
    return %c0_i32, %c0_i32_0 : i32, i32
  }
  func.func @transform_4(%arg0: i32, %arg1: i32) -> (i32, i32) {
    %c0_i32 = arith.constant 0 : i32
    %c0_i32_0 = arith.constant 0 : i32
    %c0_i32_1 = arith.constant 0 : i32
    return %c0_i32, %c0_i32_0 : i32, i32
  }
  func.func @transform_5(%arg0: i32, %arg1: i32) -> (i32, i32, i32) {
    %c0_i32 = arith.constant 0 : i32
    %c0_i32_0 = arith.constant 0 : i32
    return %arg0, %arg1, %c0_i32 : i32, i32, i32
  }
  func.func @transform_6(%arg0: i32, %arg1: i32) -> (i32, i32, i32) {
    %c0_i32 = arith.constant 0 : i32
    %c0_i32_0 = arith.constant 0 : i32
    return %arg0, %arg1, %c0_i32 : i32, i32, i32
  }
  func.func @transform_7(%arg0: i32, %arg1: i32) -> (i32, i32, i32) {
    %c0_i32 = arith.constant 0 : i32
    %c0_i32_0 = arith.constant 0 : i32
    return %arg0, %arg1, %c0_i32 : i32, i32, i32
  }
}

module attributes {stable_mosaic.version = 11 : i64} {
  func.func @qkv_kernel(%arg0: i32, %arg1: i32, %arg2: memref<1x16x128xf32, #tpu.memory_space<vmem>>, %arg3: memref<1x128xf32, #tpu.memory_space<vmem>>, %arg4: memref<1x128xf32, #tpu.memory_space<vmem>>, %arg5: memref<128x384xf32, #tpu.memory_space<vmem>>, %arg6: memref<1x384xf32, #tpu.memory_space<vmem>>, %arg7: memref<1x16x128xf32, #tpu.memory_space<vmem>>, %arg8: memref<1x16x128xf32, #tpu.memory_space<vmem>>, %arg9: memref<1x16x128xf32, #tpu.memory_space<vmem>>) attributes {dimension_semantics = [#tpu.dimension_semantics<parallel>, #tpu.dimension_semantics<parallel>], iteration_bounds = array<i64: 2, 4>, scalar_prefetch = 0 : i64, scratch_operands = 0 : i64, tpu.core_type = #tpu.core_type<tc>, window_params = [{transform_indices = @transform_0, window_bounds = array<i64: 1, 16, 128>}, {pipeline_mode = #tpu.pipeline_mode<synchronous>, transform_indices = @transform_1, window_bounds = array<i64: 1, 128>}, {pipeline_mode = #tpu.pipeline_mode<synchronous>, transform_indices = @transform_2, window_bounds = array<i64: 1, 128>}, {pipeline_mode = #tpu.pipeline_mode<synchronous>, transform_indices = @transform_3, window_bounds = array<i64: 128, 384>}, {pipeline_mode = #tpu.pipeline_mode<synchronous>, transform_indices = @transform_4, window_bounds = array<i64: 1, 384>}, {transform_indices = @transform_5, window_bounds = array<i64: 1, 16, 128>}, {transform_indices = @transform_6, window_bounds = array<i64: 1, 16, 128>}, {transform_indices = @transform_7, window_bounds = array<i64: 1, 16, 128>}]} {
    %c0 = arith.constant 0 : index
    %c0_0 = arith.constant 0 : index
    %c0_1 = arith.constant 0 : index
    %0 = vector.load %arg2[%c0, %c0_0, %c0_1] : memref<1x16x128xf32, #tpu.memory_space<vmem>>, vector<1x16x128xf32>
    %1 = vector.shape_cast %0 : vector<1x16x128xf32> to vector<16x128xf32>
    %c0_2 = arith.constant 0 : index
    %c0_3 = arith.constant 0 : index
    %2 = vector.load %arg3[%c0_2, %c0_3] : memref<1x128xf32, #tpu.memory_space<vmem>>, vector<1x128xf32>
    %c0_4 = arith.constant 0 : index
    %c0_5 = arith.constant 0 : index
    %3 = vector.load %arg4[%c0_4, %c0_5] : memref<1x128xf32, #tpu.memory_space<vmem>>, vector<1x128xf32>
    %cst = arith.constant dense<0.000000e+00> : vector<16xf32>
    %4 = vector.multi_reduction <add>, %1, %cst [1] : vector<16x128xf32> to vector<16xf32>
    %5 = vector.shape_cast %4 : vector<16xf32> to vector<16x1xf32>
    %cst_6 = arith.constant 1.280000e+02 : f32
    %6 = vector.broadcast %cst_6 : f32 to vector<16x1xf32>
    %7 = arith.divf %5, %6 : vector<16x1xf32>
    %8 = vector.broadcast %7 : vector<16x1xf32> to vector<16x128xf32>
    %9 = arith.subf %1, %8 : vector<16x128xf32>
    %10 = arith.mulf %9, %9 : vector<16x128xf32>
    %cst_7 = arith.constant dense<0.000000e+00> : vector<16xf32>
    %11 = vector.multi_reduction <add>, %10, %cst_7 [1] : vector<16x128xf32> to vector<16xf32>
    %12 = vector.shape_cast %11 : vector<16xf32> to vector<16x1xf32>
    %cst_8 = arith.constant 1.280000e+02 : f32
    %13 = vector.broadcast %cst_8 : f32 to vector<16x1xf32>
    %14 = arith.divf %12, %13 : vector<16x1xf32>
    %15 = vector.broadcast %7 : vector<16x1xf32> to vector<16x128xf32>
    %16 = arith.subf %1, %15 : vector<16x128xf32>
    %cst_9 = arith.constant 9.99999974E-6 : f32
    %17 = vector.broadcast %cst_9 : f32 to vector<16x1xf32>
    %18 = arith.addf %14, %17 : vector<16x1xf32>
    %19 = math.rsqrt %18 : vector<16x1xf32>
    %20 = vector.broadcast %19 : vector<16x1xf32> to vector<16x128xf32>
    %21 = arith.mulf %16, %20 : vector<16x128xf32>
    %22 = vector.broadcast %2 : vector<1x128xf32> to vector<16x128xf32>
    %23 = arith.mulf %21, %22 : vector<16x128xf32>
    %24 = vector.broadcast %3 : vector<1x128xf32> to vector<16x128xf32>
    %25 = arith.addf %23, %24 : vector<16x128xf32>
    %c0_10 = arith.constant 0 : index
    %c0_11 = arith.constant 0 : index
    %26 = vector.load %arg5[%c0_10, %c0_11] : memref<128x384xf32, #tpu.memory_space<vmem>>, vector<128x384xf32>
    %cst_12 = arith.constant dense<0.000000e+00> : vector<16x384xf32>
    %27 = tpu.matmul %25, %26, %cst_12 {dimension_numbers = #tpu.dot_dimension_numbers<[1], [0], [0], [1], [0, 0, 1, 1], [], []>} : vector<16x128xf32>, vector<128x384xf32>, vector<16x384xf32> -> vector<16x384xf32>
    %c0_13 = arith.constant 0 : index
    %c0_14 = arith.constant 0 : index
    %28 = vector.load %arg6[%c0_13, %c0_14] : memref<1x384xf32, #tpu.memory_space<vmem>>, vector<1x384xf32>
    %29 = vector.broadcast %28 : vector<1x384xf32> to vector<16x384xf32>
    %30 = arith.addf %27, %29 : vector<16x384xf32>
    %31 = vector.extract_strided_slice %30 {offsets = [0, 0], sizes = [16, 128], strides = [1, 1]} : vector<16x384xf32> to vector<16x128xf32>
    %cst_15 = arith.constant 0.176776692 : f32
    %32 = vector.broadcast %cst_15 : f32 to vector<16x128xf32>
    %33 = arith.mulf %31, %32 : vector<16x128xf32>
    %c0_16 = arith.constant 0 : index
    %c0_17 = arith.constant 0 : index
    %c0_18 = arith.constant 0 : index
    %34 = vector.load %arg7[%c0_16, %c0_17, %c0_18] : memref<1x16x128xf32, #tpu.memory_space<vmem>>, vector<1x16x128xf32>
    %35 = vector.shape_cast %34 : vector<1x16x128xf32> to vector<16x128xf32>
    %36 = vector.shape_cast %33 : vector<16x128xf32> to vector<1x16x128xf32>
    tpu.vector_store %arg7[%c0_16, %c0_17, %c0_18], %36 {strides = array<i32>} : memref<1x16x128xf32, #tpu.memory_space<vmem>>, vector<1x16x128xf32>,
    %37 = vector.extract_strided_slice %30 {offsets = [0, 128], sizes = [16, 128], strides = [1, 1]} : vector<16x384xf32> to vector<16x128xf32>
    %c0_19 = arith.constant 0 : index
    %c0_20 = arith.constant 0 : index
    %c0_21 = arith.constant 0 : index
    %38 = vector.load %arg8[%c0_19, %c0_20, %c0_21] : memref<1x16x128xf32, #tpu.memory_space<vmem>>, vector<1x16x128xf32>
    %39 = vector.shape_cast %38 : vector<1x16x128xf32> to vector<16x128xf32>
    %40 = vector.shape_cast %37 : vector<16x128xf32> to vector<1x16x128xf32>
    tpu.vector_store %arg8[%c0_19, %c0_20, %c0_21], %40 {strides = array<i32>} : memref<1x16x128xf32, #tpu.memory_space<vmem>>, vector<1x16x128xf32>,
    %41 = vector.extract_strided_slice %30 {offsets = [0, 256], sizes = [16, 128], strides = [1, 1]} : vector<16x384xf32> to vector<16x128xf32>
    %c0_22 = arith.constant 0 : index
    %c0_23 = arith.constant 0 : index
    %c0_24 = arith.constant 0 : index
    %42 = vector.load %arg9[%c0_22, %c0_23, %c0_24] : memref<1x16x128xf32, #tpu.memory_space<vmem>>, vector<1x16x128xf32>
    %43 = vector.shape_cast %42 : vector<1x16x128xf32> to vector<16x128xf32>
    %44 = vector.shape_cast %41 : vector<16x128xf32> to vector<1x16x128xf32>
    tpu.vector_store %arg9[%c0_22, %c0_23, %c0_24], %44 {strides = array<i32>} : memref<1x16x128xf32, #tpu.memory_space<vmem>>, vector<1x16x128xf32>,
    return
  }
  func.func @transform_0(%arg0: i32, %arg1: i32) -> (i32, i32, i32) {
    %c0_i32 = arith.constant 0 : i32
    %c0_i32_0 = arith.constant 0 : i32
    return %arg0, %arg1, %c0_i32 : i32, i32, i32
  }
  func.func @transform_1(%arg0: i32, %arg1: i32) -> (i32, i32) {
    %c0_i32 = arith.constant 0 : i32
    %c0_i32_0 = arith.constant 0 : i32
    %c0_i32_1 = arith.constant 0 : i32
    return %c0_i32, %c0_i32_0 : i32, i32
  }
  func.func @transform_2(%arg0: i32, %arg1: i32) -> (i32, i32) {
    %c0_i32 = arith.constant 0 : i32
    %c0_i32_0 = arith.constant 0 : i32
    %c0_i32_1 = arith.constant 0 : i32
    return %c0_i32, %c0_i32_0 : i32, i32
  }
  func.func @transform_3(%arg0: i32, %arg1: i32) -> (i32, i32) {
    %c0_i32 = arith.constant 0 : i32
    %c0_i32_0 = arith.constant 0 : i32
    %c0_i32_1 = arith.constant 0 : i32
    return %c0_i32, %c0_i32_0 : i32, i32
  }
  func.func @transform_4(%arg0: i32, %arg1: i32) -> (i32, i32) {
    %c0_i32 = arith.constant 0 : i32
    %c0_i32_0 = arith.constant 0 : i32
    %c0_i32_1 = arith.constant 0 : i32
    return %c0_i32, %c0_i32_0 : i32, i32
  }
  func.func @transform_5(%arg0: i32, %arg1: i32) -> (i32, i32, i32) {
    %c0_i32 = arith.constant 0 : i32
    %c0_i32_0 = arith.constant 0 : i32
    return %arg0, %arg1, %c0_i32 : i32, i32, i32
  }
  func.func @transform_6(%arg0: i32, %arg1: i32) -> (i32, i32, i32) {
    %c0_i32 = arith.constant 0 : i32
    %c0_i32_0 = arith.constant 0 : i32
    return %arg0, %arg1, %c0_i32 : i32, i32, i32
  }
  func.func @transform_7(%arg0: i32, %arg1: i32) -> (i32, i32, i32) {
    %c0_i32 = arith.constant 0 : i32
    %c0_i32_0 = arith.constant 0 : i32
    return %arg0, %arg1, %c0_i32 : i32, i32, i32
  }
}

</mosaic_0001>

<llo_original>
// kernel: tpu_custom_call.1
$region0: #{tpu_custom_call.1}
  #allocation0 [shape = 'u32[]', space=smem, size = 0x4, offset = 0x4, fixed_abs, tag = 'smem constant byte address 0x4 - core index']
  #allocation1 [shape = 'u32[72,128]{1,0:T(1,128)}', space=vmem, size = 0x9000, scoped, tag = 'internal scratch']
  %s0 = inlined_call_operand.hbm [shape: f32[2,64,128], index: 0, kind: input, shape index: {}]
  %s1 = inlined_call_operand.hbm [shape: f32[1,128], index: 1, kind: input, shape index: {}]
  %s2 = inlined_call_operand.hbm [shape: f32[1,128], index: 2, kind: input, shape index: {}]
  %s3 = inlined_call_operand.hbm [shape: f32[128,384], index: 3, kind: input, shape index: {}]
  %s4 = inlined_call_operand.vmem [shape: f32[1,384], index: 4, kind: input, shape index: {}]
  %s5 = inlined_call_operand.hbm [shape: f32[2,64,128], index: 5, kind: output, shape index: {0}]
  %s6 = inlined_call_operand.hbm [shape: f32[2,64,128], index: 6, kind: output, shape index: {1}]
  %s7 = inlined_call_operand.hbm [shape: f32[2,64,128], index: 7, kind: output, shape index: {2}]
  %8 = xla_tuple %s5, %s6, %s7
  %s9 = sld [smem:[#allocation0]]
  $region85: #{tpu_custom_call.1} parent=0
    _
  %s11 = ssub.s32 1, %s9
  %s12 = scalar_select 0, %s11, %s9
  $region1: #{tpu_custom_call.1} parent=0
    #allocation2 [shape = 'u8[16384]{0}', space=vmem, size = 0x4000, scoped, tag = 'input window, operand 0']
    #allocation3 [shape = 's32[2]{0}', space=sflag, size = 0x8, scoped, tag = 'scoped memory for tpu_custom_call.1']
    #allocation4 [shape = 's32[2]{0}', space=sflag, size = 0x8, scoped, tag = 'scoped memory for tpu_custom_call.1']
    #allocation5 [shape = 'u8[512]{0}', space=vmem, size = 0x400, scoped, tag = 'input window, operand 1, single buffered']
    #allocation6 [shape = 's32[1]{0}', space=sflag, size = 0x4, scoped, tag = 'scoped memory for tpu_custom_call.1']
    #allocation7 [shape = 'u8[512]{0}', space=vmem, size = 0x400, scoped, tag = 'input window, operand 2, single buffered']
    #allocation8 [shape = 'u8[196608]{0}', space=vmem, size = 0x30000, scoped, tag = 'input window, operand 3, single buffered']
    #allocation9 [shape = 's32[1]{0}', space=sflag, size = 0x4, scoped, tag = 'scoped memory for tpu_custom_call.1']
    #allocation10 [shape = 'u8[16384]{0}', space=vmem, size = 0x4000, scoped, tag = 'output window, operand 0']
    #allocation11 [shape = 'u8[16384]{0}', space=vmem, size = 0x4000, scoped, tag = 'output window, operand 1']
    #allocation12 [shape = 's32[2]{0}', space=sflag, size = 0x8, scoped, tag = 'scoped memory for tpu_custom_call.1']
    #allocation13 [shape = 'u8[16384]{0}', space=vmem, size = 0x4000, scoped, tag = 'output window, operand 2']
    %13 = vsyncpa [#allocation3], 0
    %s14 = scalar_lea.sflag [#allocation3], 1
    %15 = vsyncpa %s14, 0
    %16 = vsyncpa [#allocation6], 0
    %17 = vsyncpa [#allocation9], 0
    %18 = vsyncpa [#allocation4], 0
    %s19 = scalar_lea.sflag [#allocation4], 1
    %20 = vsyncpa %s19, 0
    %21 = vsyncpa [#allocation12], 0
    %s22 = scalar_lea.sflag [#allocation12], 1
    %23 = vsyncpa %s22, 0
    loop: start=0, step=1, limit=10
    $region2: #{tpu_custom_call.1} parent=1 // loop_pre_header
      _
    $region3: #{tpu_custom_call.1} parent=1 // loop_header
      %s25 = sphi 0, %s29
      %p26 = scmp.ge.s32.totalorder %s25, 10
      %s32 = sphi 0, %s44
      %s33 = sphi 0, %s40
      %s34 = sphi 0, %s32
      %s35 = sphi 0, %s33
      %s36 = sphi 0, %s34
      %s37 = sphi 0, %s35
      %s49 = sphi 0, %s51
      %s52 = sphi 0, %s49
      %s53 = sphi 0, %s52
      %s69 = sphi 0, %s53
      %s73 = sphi 0, %s73
      %s75 = sphi 0, %s73
      %s76 = sphi 0, %s75
      %s90 = sphi 0, %s76
      %s94 = sphi 0, %s94
      %s96 = sphi 0, %s94
      %s97 = sphi 0, %s96
      %s111 = sphi 0, %s97
      %s115 = sphi 0, %s115
      %s117 = sphi 0, %s115
      %s118 = sphi 0, %s117
      %s132 = sphi 0, %s118
      %s136 = sphi 0, %s136
      %s138 = sphi 0, %s136
      %s139 = sphi 0, %s138
      %s153 = sphi 0, %s139
      %s161 = sphi 0, %s163
      %s164 = sphi 0, %s161
      %s165 = sphi 0, %s164
      %s181 = sphi 0, %s165
      %s189 = sphi 0, %s191
      %s192 = sphi 0, %s189
      %s193 = sphi 0, %s192
      %s209 = sphi 0, %s193
      %s217 = sphi 0, %s219
      %s220 = sphi 0, %s217
      %s221 = sphi 0, %s220
      %s237 = sphi 0, %s221
    $region4: #{tpu_custom_call.1} parent=1 // loop_header_branch
      %28 = sbr.rel (%p26) target = $region8
    $region5: #{tpu_custom_call.1} parent=1 // loop_body
      %s30 = ssub.s32 %s25, 1
      %s31 = ssub.s32 %s25, 2
      %s38 = sadd.s32 1, %s33
      %p39 = scmp.ge.s32.totalorder %s38, 4
      %s40 = scalar_select %p39, 0, %s38
      %s41 = sadd.s32 1, %s32
      %s42 = scalar_select %p39, %s41, %s32
      %p43 = scmp.ge.s32.totalorder %s42, 2
      %s44 = scalar_select %p43, 0, %s42
      %s45 = ssub.s32 %s32, %s44
      %s46 = ssub.s32 %s33, %s40
      %s47 = sor.u32 %s45, %s46
      %p48 = scmp.eq.s32.totalorder %s47, 0
      %s50 = sadd.s32 %s49, 1
      %s51 = scalar_select %p48, %s49, %s50
      %p54 = pneg %p48
      %p55 = scmp.eq.s32.totalorder %s25, 7
      %p56 = por %p54, %p55
      %p57 = scmp.ne.s32.totalorder %s49, %s52
      %p58 = scmp.eq.s32.totalorder %s25, 0
      %p59 = por %p57, %p58
      %p60 = scmp.ne.s32.totalorder %s49, %s52
      %p61 = scmp.eq.s32.totalorder %s30, 7
      %p62 = por %p60, %p61
      %p63 = scmp.ne.s32.totalorder %s52, %s53
      %p64 = scmp.eq.s32.totalorder %s30, 0
      %p65 = por %p63, %p64
      %p66 = scmp.ne.s32.totalorder %s52, %s53
      %p67 = scmp.eq.s32.totalorder %s31, 7
      %p68 = por %p66, %p67
      %p70 = scmp.ne.s32.totalorder %s53, %s69
      %p71 = scmp.eq.s32.totalorder %s31, 0
      %p72 = por %p70, %p71
      %s74 = sadd.s32 %s73, 1
      %p77 = scmp.eq.s32.totalorder %s25, 7
      %p78 = scmp.ne.s32.totalorder %s73, %s75
      %p79 = scmp.eq.s32.totalorder %s25, 0
      %p80 = por %p78, %p79
      %p81 = scmp.ne.s32.totalorder %s73, %s75
      %p82 = scmp.eq.s32.totalorder %s30, 7
      %p83 = por %p81, %p82
      %p84 = scmp.ne.s32.totalorder %s75, %s76
      %p85 = scmp.eq.s32.totalorder %s30, 0
      %p86 = por %p84, %p85
      %p87 = scmp.ne.s32.totalorder %s75, %s76
      %p88 = scmp.eq.s32.totalorder %s31, 7
      %p89 = por %p87, %p88
      %p91 = scmp.ne.s32.totalorder %s76, %s90
      %p92 = scmp.eq.s32.totalorder %s31, 0
      %p93 = por %p91, %p92
      %s95 = sadd.s32 %s94, 1
      %p98 = scmp.eq.s32.totalorder %s25, 7
      %p99 = scmp.ne.s32.totalorder %s94, %s96
      %p100 = scmp.eq.s32.totalorder %s25, 0
      %p101 = por %p99, %p100
      %p102 = scmp.ne.s32.totalorder %s94, %s96
      %p103 = scmp.eq.s32.totalorder %s30, 7
      %p104 = por %p102, %p103
      %p105 = scmp.ne.s32.totalorder %s96, %s97
      %p106 = scmp.eq.s32.totalorder %s30, 0
      %p107 = por %p105, %p106
      %p108 = scmp.ne.s32.totalorder %s96, %s97
      %p109 = scmp.eq.s32.totalorder %s31, 7
      %p110 = por %p108, %p109
      %p112 = scmp.ne.s32.totalorder %s97, %s111
      %p113 = scmp.eq.s32.totalorder %s31, 0
      %p114 = por %p112, %p113
      %s116 = sadd.s32 %s115, 1
      %p119 = scmp.eq.s32.totalorder %s25, 7
      %p120 = scmp.ne.s32.totalorder %s115, %s117
      %p121 = scmp.eq.s32.totalorder %s25, 0
      %p122 = por %p120, %p121
      %p123 = scmp.ne.s32.totalorder %s115, %s117
      %p124 = scmp.eq.s32.totalorder %s30, 7
      %p125 = por %p123, %p124
      %p126 = scmp.ne.s32.totalorder %s117, %s118
      %p127 = scmp.eq.s32.totalorder %s30, 0
      %p128 = por %p126, %p127
      %p129 = scmp.ne.s32.totalorder %s117, %s118
      %p130 = scmp.eq.s32.totalorder %s31, 7
      %p131 = por %p129, %p130
      %p133 = scmp.ne.s32.totalorder %s118, %s132
      %p134 = scmp.eq.s32.totalorder %s31, 0
      %p135 = por %p133, %p134
      %s137 = sadd.s32 %s136, 1
      %p140 = scmp.eq.s32.totalorder %s25, 7
      %p141 = scmp.ne.s32.totalorder %s136, %s138
      %p142 = scmp.eq.s32.totalorder %s25, 0
      %p143 = por %p141, %p142
      %p144 = scmp.ne.s32.totalorder %s136, %s138
      %p145 = scmp.eq.s32.totalorder %s30, 7
      %p146 = por %p144, %p145
      %p147 = scmp.ne.s32.totalorder %s138, %s139
      %p148 = scmp.eq.s32.totalorder %s30, 0
      %p149 = por %p147, %p148
      %p150 = scmp.ne.s32.totalorder %s138, %s139
      %p151 = scmp.eq.s32.totalorder %s31, 7
      %p152 = por %p150, %p151
      %p154 = scmp.ne.s32.totalorder %s139, %s153
      %p155 = scmp.eq.s32.totalorder %s31, 0
      %p156 = por %p154, %p155
      %s157 = ssub.s32 %s32, %s44
      %s158 = ssub.s32 %s33, %s40
      %s159 = sor.u32 %s157, %s158
      %p160 = scmp.eq.s32.totalorder %s159, 0
      %s162 = sadd.s32 %s161, 1
      %s163 = scalar_select %p160, %s161, %s162
      %p166 = pneg %p160
      %p167 = scmp.eq.s32.totalorder %s25, 7
      %p168 = por %p166, %p167
      %p169 = scmp.ne.s32.totalorder %s161, %s164
      %p170 = scmp.eq.s32.totalorder %s25, 0
      %p171 = por %p169, %p170
      %p172 = scmp.ne.s32.totalorder %s161, %s164
      %p173 = scmp.eq.s32.totalorder %s30, 7
      %p174 = por %p172, %p173
      %p175 = scmp.ne.s32.totalorder %s164, %s165
      %p176 = scmp.eq.s32.totalorder %s30, 0
      %p177 = por %p175, %p176
      %p178 = scmp.ne.s32.totalorder %s164, %s165
      %p179 = scmp.eq.s32.totalorder %s31, 7
      %p180 = por %p178, %p179
      %p182 = scmp.ne.s32.totalorder %s165, %s181
      %p183 = scmp.eq.s32.totalorder %s31, 0
      %p184 = por %p182, %p183
      %s185 = ssub.s32 %s32, %s44
      %s186 = ssub.s32 %s33, %s40
      %s187 = sor.u32 %s185, %s186
      %p188 = scmp.eq.s32.totalorder %s187, 0
      %s190 = sadd.s32 %s189, 1
      %s191 = scalar_select %p188, %s189, %s190
      %p194 = pneg %p188
      %p195 = scmp.eq.s32.totalorder %s25, 7
      %p196 = por %p194, %p195
      %p197 = scmp.ne.s32.totalorder %s189, %s192
      %p198 = scmp.eq.s32.totalorder %s25, 0
      %p199 = por %p197, %p198
      %p200 = scmp.ne.s32.totalorder %s189, %s192
      %p201 = scmp.eq.s32.totalorder %s30, 7
      %p202 = por %p200, %p201
      %p203 = scmp.ne.s32.totalorder %s192, %s193
      %p204 = scmp.eq.s32.totalorder %s30, 0
      %p205 = por %p203, %p204
      %p206 = scmp.ne.s32.totalorder %s192, %s193
      %p207 = scmp.eq.s32.totalorder %s31, 7
      %p208 = por %p206, %p207
      %p210 = scmp.ne.s32.totalorder %s193, %s209
      %p211 = scmp.eq.s32.totalorder %s31, 0
      %p212 = por %p210, %p211
      %s213 = ssub.s32 %s32, %s44
      %s214 = ssub.s32 %s33, %s40
      %s215 = sor.u32 %s213, %s214
      %p216 = scmp.eq.s32.totalorder %s215, 0
      %s218 = sadd.s32 %s217, 1
      %s219 = scalar_select %p216, %s217, %s218
      %p222 = pneg %p216
      %p223 = scmp.eq.s32.totalorder %s25, 7
      %p224 = por %p222, %p223
      %p225 = scmp.ne.s32.totalorder %s217, %s220
      %p226 = scmp.eq.s32.totalorder %s25, 0
      %p227 = por %p225, %p226
      %p228 = scmp.ne.s32.totalorder %s217, %s220
      %p229 = scmp.eq.s32.totalorder %s30, 7
      %p230 = por %p228, %p229
      %p231 = scmp.ne.s32.totalorder %s220, %s221
      %p232 = scmp.eq.s32.totalorder %s30, 0
      %p233 = por %p231, %p232
      %p234 = scmp.ne.s32.totalorder %s220, %s221
      %p235 = scmp.eq.s32.totalorder %s31, 7
      %p236 = por %p234, %p235
      %p238 = scmp.ne.s32.totalorder %s221, %s237
      %p239 = scmp.eq.s32.totalorder %s31, 0
      %p240 = por %p238, %p239
      %p241 = scmp.le.s32.totalorder 1, %s25
      %p242 = scmp.lt.s32.totalorder %s25, 9
      %p243 = pnand %p241, %p242
      %p244 = pneg %p243
      // Predicated region
      $region9: #{tpu_custom_call.1} parent=5 // pred_check
        _
      $region10: #{tpu_custom_call.1} parent=5 // pred_check_branch
        %246 = sbr.rel (%p243) target = $region12
      $region11: #{tpu_custom_call.1} parent=5 // pred_region
        %s247 = ssub.s32 %s25, 1
        // Predicated region
        $region13: #{tpu_custom_call.1} parent=11 // pred_check
          %p248 = pneg %p86
        $region14: #{tpu_custom_call.1} parent=11 // pred_check_branch
          %250 = sbr.rel (%p248) target = $region16
        $region15: #{tpu_custom_call.1} parent=11 // pred_region
          %252 = vsyncadd [#allocation6], 0
          %s254 = sshll.u32 %s1, 4
          %s255 = int_to_ptr.hbm [resolvable:$true] %s254
          %s256 = sshll.u32 [#allocation5], 4
          %s257 = int_to_ptr.vmem [resolvable:$true] %s256
          %259 = dma.hbm_to_vmem [thread:$0]  %s255, 16, %s257, [#allocation6]
        $region16: #{tpu_custom_call.1} parent=11 // pred_fallthru
          _
        // Predicated region
        $region17: #{tpu_custom_call.1} parent=11 // pred_check
          %p260 = pneg %p107
        $region18: #{tpu_custom_call.1} parent=11 // pred_check_branch
          %262 = sbr.rel (%p260) target = $region20
        $region19: #{tpu_custom_call.1} parent=11 // pred_region
          %264 = vsyncadd [#allocation6], 0
          %s266 = sshll.u32 %s2, 4
          %s267 = int_to_ptr.hbm [resolvable:$true] %s266
          %s268 = sshll.u32 [#allocation7], 4
          %s269 = int_to_ptr.vmem [resolvable:$true] %s268
          %271 = dma.hbm_to_vmem [thread:$0]  %s267, 16, %s269, [#allocation6]
        $region20: #{tpu_custom_call.1} parent=11 // pred_fallthru
          _
        // Predicated region
        $region21: #{tpu_custom_call.1} parent=11 // pred_check
          %p272 = pneg %p128
        $region22: #{tpu_custom_call.1} parent=11 // pred_check_branch
          %274 = sbr.rel (%p272) target = $region24
        $region23: #{tpu_custom_call.1} parent=11 // pred_region
          %276 = vsyncadd [#allocation9], 0
          %s277 = sshll.u32 %s3, 4
          %s278 = int_to_ptr.hbm [resolvable:$true] %s277
          %s279 = sshll.u32 [#allocation8], 4
          %s280 = int_to_ptr.vmem [resolvable:$true] %s279
          %285 = dma.hbm_to_vmem [thread:$0]  %s278, 6144, %s280, [#allocation9], 384, 384, 24
        $region24: #{tpu_custom_call.1} parent=11 // pred_fallthru
          _
        // Predicated region
        $region25: #{tpu_custom_call.1} parent=11 // pred_check
          %p286 = pneg %p149
        $region26: #{tpu_custom_call.1} parent=11 // pred_check_branch
          %288 = sbr.rel (%p286) target = $region28
        $region27: #{tpu_custom_call.1} parent=11 // pred_region
          _
        $region28: #{tpu_custom_call.1} parent=11 // pred_fallthru
          _
      $region12: #{tpu_custom_call.1} parent=5 // pred_fallthru
        _
      %p289 = scmp.lt.s32.totalorder %s25, 8
      // Predicated region
      $region29: #{tpu_custom_call.1} parent=5 // pred_check
        %p290 = pneg %p289
      $region30: #{tpu_custom_call.1} parent=5 // pred_check_branch
        %292 = sbr.rel (%p290) target = $region32
      $region31: #{tpu_custom_call.1} parent=5 // pred_region
        // Predicated region
        $region33: #{tpu_custom_call.1} parent=31 // pred_check
          %p293 = pneg %p59
        $region34: #{tpu_custom_call.1} parent=31 // pred_check_branch
          %295 = sbr.rel (%p293) target = $region36
        $region35: #{tpu_custom_call.1} parent=31 // pred_region
          %s296 = sand.u32 %s49, 1
          %s297 = scalar_lea.sflag [#allocation3], %s296
          %s298 = sand.u32 %s49, 1
          %s299 = smul.addr %s298, 16
          %s300 = scalar_lea.vmem [#allocation2], %s299
          %s301 = smul.u32 2, %s33
          %303 = vsyncadd %s297, 0
          %s304 = smul.addr %s32, 8
          %s305 = sadd.s32 %s301, %s304
          %s306 = smul.addr %s305, 8
          %s307 = scalar_lea.hbm %s0, %s306
          %s308 = sshll.u32 %s307, 4
          %s309 = int_to_ptr.hbm [resolvable:$true] %s308
          %s310 = sshll.u32 %s300, 4
          %s311 = int_to_ptr.vmem [resolvable:$true] %s310
          %316 = dma.hbm_to_vmem [thread:$0]  %s309, 256, %s311, %s297, 128, 128, 8
        $region36: #{tpu_custom_call.1} parent=31 // pred_fallthru
          _
      $region32: #{tpu_custom_call.1} parent=5 // pred_fallthru
        _
      %p317 = scmp.le.s32.totalorder 1, %s25
      %p318 = scmp.lt.s32.totalorder %s25, 9
      %p319 = pnand %p317, %p318
      %p320 = pneg %p319
      // Predicated region
      $region37: #{tpu_custom_call.1} parent=5 // pred_check
        _
      $region38: #{tpu_custom_call.1} parent=5 // pred_check_branch
        %322 = sbr.rel (%p319) target = $region40
      $region39: #{tpu_custom_call.1} parent=5 // pred_region
        %s323 = ssub.s32 %s25, 1
        %s324 = sand.u32 %s52, 1
        %s325 = scalar_lea.sflag [#allocation3], %s324
        %s326 = sand.u32 %s52, 1
        %s327 = smul.addr %s326, 16
        %s328 = scalar_lea.vmem [#allocation2], %s327
        // Predicated region
        $region41: #{tpu_custom_call.1} parent=39 // pred_check
          %p329 = pneg %p65
        $region42: #{tpu_custom_call.1} parent=39 // pred_check_branch
          %331 = sbr.rel (%p329) target = $region44
        $region43: #{tpu_custom_call.1} parent=39 // pred_region
          %333 = dma.done %s325, 256
        $region44: #{tpu_custom_call.1} parent=39 // pred_fallthru
          _
        // Predicated region
        $region45: #{tpu_custom_call.1} parent=39 // pred_check
          %p334 = pneg %p86
        $region46: #{tpu_custom_call.1} parent=39 // pred_check_branch
          %336 = sbr.rel (%p334) target = $region48
        $region47: #{tpu_custom_call.1} parent=39 // pred_region
          %338 = dma.done [#allocation6], 16
        $region48: #{tpu_custom_call.1} parent=39 // pred_fallthru
          _
        // Predicated region
        $region49: #{tpu_custom_call.1} parent=39 // pred_check
          %p339 = pneg %p107
        $region50: #{tpu_custom_call.1} parent=39 // pred_check_branch
          %341 = sbr.rel (%p339) target = $region52
        $region51: #{tpu_custom_call.1} parent=39 // pred_region
          %343 = dma.done [#allocation6], 16
        $region52: #{tpu_custom_call.1} parent=39 // pred_fallthru
          _
        // Predicated region
        $region53: #{tpu_custom_call.1} parent=39 // pred_check
          %p344 = pneg %p128
        $region54: #{tpu_custom_call.1} parent=39 // pred_check_branch
          %346 = sbr.rel (%p344) target = $region56
        $region55: #{tpu_custom_call.1} parent=39 // pred_region
          %348 = dma.done [#allocation9], 6144
        $region56: #{tpu_custom_call.1} parent=39 // pred_fallthru
          _
        %s349 = sand.u32 %s52, 1
        %s350 = scalar_lea.sflag [#allocation3], %s349
        %s351 = sand.u32 %s52, 1
        %s352 = smul.addr %s351, 16
        %s353 = scalar_lea.vmem [#allocation2], %s352
        %p354 = pneg %p65
        %p355 = pneg %p62
        %p356 = pneg %p86
        %p357 = pneg %p83
        %p358 = pneg %p107
        %p359 = pneg %p104
        %p360 = pneg %p128
        %p361 = pneg %p125
        %p362 = pneg %p149
        %p363 = pneg %p146
        %p364 = pneg %p177
        %p365 = pneg %p174
        %s366 = sand.u32 %s164, 1
        %s367 = scalar_lea.sflag [#allocation4], %s366
        %s368 = sand.u32 %s164, 1
        %s369 = smul.addr %s368, 16
        %s370 = scalar_lea.vmem [#allocation10], %s369
        %p371 = pneg %p205
        %p372 = pneg %p202
        %s373 = sand.u32 %s30, 1
        %s374 = scalar_lea.sflag [#allocation12], %s373
        %s375 = sand.u32 %s192, 1
        %s376 = smul.addr %s375, 16
        %s377 = scalar_lea.vmem [#allocation11], %s376
        %p378 = pneg %p233
        %p379 = pneg %p230
        %s380 = sand.u32 %s30, 1
        %s381 = scalar_lea.sflag [#allocation12], %s380
        %s382 = sand.u32 %s220, 1
        %s383 = smul.addr %s382, 16
        %s384 = scalar_lea.vmem [#allocation13], %s383
        %s385 = smul.u32 2, %s35
        %s386 = smul.u32 2, %s35
        %s387 = smul.u32 2, %s35
        %s388 = smul.u32 2, %s35
        %v389 = vld [vmem:[%s328] sm:$0xff]
        %v390 = vld [vmem:[%s328 + $0x8] sm:$0xff]
        %v391 = vld [vmem:[#allocation5] sm:$0x1]
        %v392 = vld [vmem:[#allocation7] sm:$0x1]
        %393 = vadd.xlane.f32.xlu0 %v389
        %v394 = vpop.xlane.xlu0 %393
        %395 = vadd.xlane.f32.xlu0 %v390
        %v396 = vpop.xlane.xlu0 %395
        %v397 = vrcp.pop 128.0
        %v398 = vmul.f32 128.0, %v397
        %v399 = vsub.f32 1.0, %v398
        %v400 = vmul.f32 %v397, %v399
        %v401 = vadd.f32 %v397, %v400
        %vm402 = vweird.f32 %v397
        %v403 = vsel %vm402, %v397, %v401
        %v404 = vmul.f32 %v394, %v403
        %v405 = vmul.f32 %v396, %v403
        %v406 = vsub.f32 %v389, %v404
        %v407 = vsub.f32 %v390, %v405
        %v408 = vmul.f32 %v406, %v406
        %v409 = vmul.f32 %v407, %v407
        %410 = vadd.xlane.f32.xlu0 %v408
        %v411 = vpop.xlane.xlu0 %410
        %412 = vadd.xlane.f32.xlu0 %v409
        %v413 = vpop.xlane.xlu0 %412
        %v414 = vmul.f32 %v411, %v403
        %v415 = vmul.f32 %v413, %v403
        %v416 = vadd.f32 %v414, 1e-05
        %v417 = vadd.f32 %v415, 1e-05
        %v418 = vrsqrt.pop %v416
        %v419 = vmul.f32 %v418, %v416
        %v420 = vmul.f32 %v419, %v418
        %v421 = vmul.f32 0.5, %v420
        %v422 = vsub.f32 1.5, %v421
        %v423 = vmul.f32 %v418, %v422
        %vm424 = vweird.f32 %v416
        %vm425 = vweird.f32 %v418
        %vm426 = vmor %vm424, %vm425
        %v427 = vsel %vm426, %v418, %v423
        %v428 = vrsqrt.pop %v417
        %v429 = vmul.f32 %v428, %v417
        %v430 = vmul.f32 %v429, %v428
        %v431 = vmul.f32 0.5, %v430
        %v432 = vsub.f32 1.5, %v431
        %v433 = vmul.f32 %v428, %v432
        %vm434 = vweird.f32 %v417
        %vm435 = vweird.f32 %v428
        %vm436 = vmor %vm434, %vm435
        %v437 = vsel %vm436, %v428, %v433
        %v438 = vmul.f32 %v406, %v427
        %v439 = vmul.f32 %v407, %v437
        %v441 = vperm.slane %v391, 0
        %v443 = vmul.f32 %v438, %v441
        %v444 = vmul.f32 %v439, %v441
        %v446 = vperm.slane %v392, 0
        %v448 = vadd.f32 %v443, %v446
        %v449 = vadd.f32 %v444, %v446
        %v450 = vld [vmem:[#allocation8] sm:$0xff]
        %v451 = vld [vmem:[#allocation8 + $0x8] sm:$0xff]
        %v452 = vld [vmem:[#allocation8 + $0x10] sm:$0xff]
        %v453 = vld [vmem:[#allocation8 + $0x18] sm:$0xff]
        %v454 = vld [vmem:[#allocation8 + $0x20] sm:$0xff]
        %v455 = vld [vmem:[#allocation8 + $0x28] sm:$0xff]
        %v456 = vld [vmem:[#allocation8 + $0x30] sm:$0xff]
        %v457 = vld [vmem:[#allocation8 + $0x38] sm:$0xff]
        %v458 = vld [vmem:[#allocation8 + $0x40] sm:$0xff]
        %v459 = vld [vmem:[#allocation8 + $0x48] sm:$0xff]
        %v460 = vld [vmem:[#allocation8 + $0x50] sm:$0xff]
        %v461 = vld [vmem:[#allocation8 + $0x58] sm:$0xff]
        %v462 = vld [vmem:[#allocation8 + $0x60] sm:$0xff]
        %v463 = vld [vmem:[#allocation8 + $0x68] sm:$0xff]
        %v464 = vld [vmem:[#allocation8 + $0x70] sm:$0xff]
        %v465 = vld [vmem:[#allocation8 + $0x78] sm:$0xff]
        %v466 = vld [vmem:[#allocation8 + $0x80] sm:$0xff]
        %v467 = vld [vmem:[#allocation8 + $0x88] sm:$0xff]
        %v468 = vld [vmem:[#allocation8 + $0x90] sm:$0xff]
        %v469 = vld [vmem:[#allocation8 + $0x98] sm:$0xff]
        %v470 = vld [vmem:[#allocation8 + $0xa0] sm:$0xff]
        %v471 = vld [vmem:[#allocation8 + $0xa8] sm:$0xff]
        %v472 = vld [vmem:[#allocation8 + $0xb0] sm:$0xff]
        %v473 = vld [vmem:[#allocation8 + $0xb8] sm:$0xff]
        %v474 = vld [vmem:[#allocation8 + $0xc0] sm:$0xff]
        %v475 = vld [vmem:[#allocation8 + $0xc8] sm:$0xff]
        %v476 = vld [vmem:[#allocation8 + $0xd0] sm:$0xff]
        %v477 = vld [vmem:[#allocation8 + $0xd8] sm:$0xff]
        %v478 = vld [vmem:[#allocation8 + $0xe0] sm:$0xff]
        %v479 = vld [vmem:[#allocation8 + $0xe8] sm:$0xff]
        %v480 = vld [vmem:[#allocation8 + $0xf0] sm:$0xff]
        %v481 = vld [vmem:[#allocation8 + $0xf8] sm:$0xff]
        %v482 = vld [vmem:[#allocation8 + $0x100] sm:$0xff]
        %v483 = vld [vmem:[#allocation8 + $0x108] sm:$0xff]
        %v484 = vld [vmem:[#allocation8 + $0x110] sm:$0xff]
        %v485 = vld [vmem:[#allocation8 + $0x118] sm:$0xff]
        %v486 = vld [vmem:[#allocation8 + $0x120] sm:$0xff]
        %v487 = vld [vmem:[#allocation8 + $0x128] sm:$0xff]
        %v488 = vld [vmem:[#allocation8 + $0x130] sm:$0xff]
        %v489 = vld [vmem:[#allocation8 + $0x138] sm:$0xff]
        %v490 = vld [vmem:[#allocation8 + $0x140] sm:$0xff]
        %v491 = vld [vmem:[#allocation8 + $0x148] sm:$0xff]
        %v492 = vld [vmem:[#allocation8 + $0x150] sm:$0xff]
        %v493 = vld [vmem:[#allocation8 + $0x158] sm:$0xff]
        %v494 = vld [vmem:[#allocation8 + $0x160] sm:$0xff]
        %v495 = vld [vmem:[#allocation8 + $0x168] sm:$0xff]
        %v496 = vld [vmem:[#allocation8 + $0x170] sm:$0xff]
        %v497 = vld [vmem:[#allocation8 + $0x178] sm:$0xff]
        %v498 = vld [vmem:[%s4] sm:$0x7]
        %v500 = vperm.slane %v498, 0
        %v501 = vperm.slane %v498, 1
        %v502 = vperm.slane %v498, 2
        %506 = vmatpush.msra.mxu0 %v495
        %507 = vmatpush.msra.mxu0 %v492
        %508 = vmatpush.msra.mxu0 %v489
        %509 = vmatpush.msra.mxu0 %v486
        %510 = vmatpush.msra.mxu0 %v483
        %511 = vmatpush.msra.mxu0 %v480
        %512 = vmatpush.msra.mxu0 %v477
        %513 = vmatpush.msra.mxu0 %v474
        %514 = vmatpush.msra.mxu0 %v471
        %515 = vmatpush.msra.mxu0 %v468
        %516 = vmatpush.msra.mxu0 %v465
        %517 = vmatpush.msra.mxu0 %v462
        %518 = vmatpush.msra.mxu0 %v459
        %519 = vmatpush.msra.mxu0 %v456
        %520 = vmatpush.msra.mxu0 %v453
        %521 = vmatpush.msra.mxu0 %v450
        %522 = vmatmul.f32.gmra.mxu0 %v448
        %v523 = vpop.f32.mrf.mxu0
        %v524 = vadd.f32 %v500, %v523
        %525 = vmatmul.f32.gmra.mxu0 %v449
        %v526 = vpop.f32.mrf.mxu0
        %v527 = vadd.f32 %v500, %v526
        %528 = vdwg.mxu0
        %529 = vmatpush.msra.mxu0 %v496
        %530 = vmatpush.msra.mxu0 %v493
        %531 = vmatpush.msra.mxu0 %v490
        %532 = vmatpush.msra.mxu0 %v487
        %533 = vmatpush.msra.mxu0 %v484
        %534 = vmatpush.msra.mxu0 %v481
        %535 = vmatpush.msra.mxu0 %v478
        %536 = vmatpush.msra.mxu0 %v475
        %537 = vmatpush.msra.mxu0 %v472
        %538 = vmatpush.msra.mxu0 %v469
        %539 = vmatpush.msra.mxu0 %v466
        %540 = vmatpush.msra.mxu0 %v463
        %541 = vmatpush.msra.mxu0 %v460
        %542 = vmatpush.msra.mxu0 %v457
        %543 = vmatpush.msra.mxu0 %v454
        %544 = vmatpush.msra.mxu0 %v451
        %545 = vmatmul.f32.gmra.mxu0 %v448
        %v546 = vpop.f32.mrf.mxu0
        %v547 = vadd.f32 %v501, %v546
        %548 = vmatmul.f32.gmra.mxu0 %v449
        %v549 = vpop.f32.mrf.mxu0
        %v550 = vadd.f32 %v501, %v549
        %551 = vdwg.mxu0
        %552 = vmatpush.msra.mxu0 %v497
        %553 = vmatpush.msra.mxu0 %v494
        %554 = vmatpush.msra.mxu0 %v491
        %555 = vmatpush.msra.mxu0 %v488
        %556 = vmatpush.msra.mxu0 %v485
        %557 = vmatpush.msra.mxu0 %v482
        %558 = vmatpush.msra.mxu0 %v479
        %559 = vmatpush.msra.mxu0 %v476
        %560 = vmatpush.msra.mxu0 %v473
        %561 = vmatpush.msra.mxu0 %v470
        %562 = vmatpush.msra.mxu0 %v467
        %563 = vmatpush.msra.mxu0 %v464
        %564 = vmatpush.msra.mxu0 %v461
        %565 = vmatpush.msra.mxu0 %v458
        %566 = vmatpush.msra.mxu0 %v455
        %567 = vmatpush.msra.mxu0 %v452
        %568 = vmatmul.f32.gmra.mxu0 %v448
        %v569 = vpop.f32.mrf.mxu0
        %v570 = vadd.f32 %v502, %v569
        %571 = vmatmul.f32.gmra.mxu0 %v449
        %v572 = vpop.f32.mrf.mxu0
        %v573 = vadd.f32 %v502, %v572
        %574 = vdwg.mxu0
        %v575 = vmul.f32 %v524, 0.17677669
        %v576 = vmul.f32 %v527, 0.17677669
        %577 = vst [vmem:[%s370] sm:$0xff] %v575
        %578 = vst [vmem:[%s370 + $0x8] sm:$0xff] %v576
        %579 = vst [vmem:[%s377] sm:$0xff] %v547
        %580 = vst [vmem:[%s377 + $0x8] sm:$0xff] %v550
        %581 = vst [vmem:[%s384] sm:$0xff] %v570
        %582 = vst [vmem:[%s384 + $0x8] sm:$0xff] %v573
        %s583 = sand.u32 %s164, 1
        %s584 = scalar_lea.sflag [#allocation4], %s583
        %s585 = sand.u32 %s164, 1
        %s586 = smul.addr %s585, 16
        %s587 = scalar_lea.vmem [#allocation10], %s586
        %s588 = sand.u32 %s30, 1
        %s589 = scalar_lea.sflag [#allocation12], %s588
        %s590 = sand.u32 %s192, 1
        %s591 = smul.addr %s590, 16
        %s592 = scalar_lea.vmem [#allocation11], %s591
        %s593 = sand.u32 %s30, 1
        %s594 = scalar_lea.sflag [#allocation12], %s593
        %s595 = sand.u32 %s220, 1
        %s596 = smul.addr %s595, 16
        %s597 = scalar_lea.vmem [#allocation13], %s596
        // Predicated region
        $region57: #{tpu_custom_call.1} parent=39 // pred_check
          %p598 = pneg %p174
        $region58: #{tpu_custom_call.1} parent=39 // pred_check_branch
          %600 = sbr.rel (%p598) target = $region60
        $region59: #{tpu_custom_call.1} parent=39 // pred_region
          %s601 = smul.u32 2, %s35
          %603 = vsyncadd %s584, 0
          %s604 = smul.addr %s34, 8
          %s605 = sadd.s32 %s601, %s604
          %s606 = smul.addr %s605, 8
          %s607 = scalar_lea.hbm %s5, %s606
          %s608 = sshll.u32 %s587, 4
          %s609 = int_to_ptr.vmem [resolvable:$true] %s608
          %s610 = sshll.u32 %s607, 4
          %s611 = int_to_ptr.hbm [resolvable:$true] %s610
          %616 = dma.vmem_to_hbm [thread:$0]  %s609, 256, %s611, %s584, 128, 128, 8
        $region60: #{tpu_custom_call.1} parent=39 // pred_fallthru
          _
        // Predicated region
        $region61: #{tpu_custom_call.1} parent=39 // pred_check
          %p617 = pneg %p202
        $region62: #{tpu_custom_call.1} parent=39 // pred_check_branch
          %619 = sbr.rel (%p617) target = $region64
        $region63: #{tpu_custom_call.1} parent=39 // pred_region
          %s620 = smul.u32 2, %s35
          %622 = vsyncadd %s589, 0
          %s623 = smul.addr %s34, 8
          %s624 = sadd.s32 %s620, %s623
          %s625 = smul.addr %s624, 8
          %s626 = scalar_lea.hbm %s6, %s625
          %s627 = sshll.u32 %s592, 4
          %s628 = int_to_ptr.vmem [resolvable:$true] %s627
          %s629 = sshll.u32 %s626, 4
          %s630 = int_to_ptr.hbm [resolvable:$true] %s629
          %635 = dma.vmem_to_hbm [thread:$0]  %s628, 256, %s630, %s589, 128, 128, 8
        $region64: #{tpu_custom_call.1} parent=39 // pred_fallthru
          _
        // Predicated region
        $region65: #{tpu_custom_call.1} parent=39 // pred_check
          %p636 = pneg %p230
        $region66: #{tpu_custom_call.1} parent=39 // pred_check_branch
          %638 = sbr.rel (%p636) target = $region68
        $region67: #{tpu_custom_call.1} parent=39 // pred_region
          %s639 = smul.u32 2, %s35
          %641 = vsyncadd %s594, 0
          %s642 = smul.addr %s34, 8
          %s643 = sadd.s32 %s639, %s642
          %s644 = smul.addr %s643, 8
          %s645 = scalar_lea.hbm %s7, %s644
          %s646 = sshll.u32 %s597, 4
          %s647 = int_to_ptr.vmem [resolvable:$true] %s646
          %s648 = sshll.u32 %s645, 4
          %s649 = int_to_ptr.hbm [resolvable:$true] %s648
          %654 = dma.vmem_to_hbm [thread:$0]  %s647, 256, %s649, %s594, 128, 128, 8
        $region68: #{tpu_custom_call.1} parent=39 // pred_fallthru
          _
      $region40: #{tpu_custom_call.1} parent=5 // pred_fallthru
        _
      %p655 = scmp.le.s32.totalorder 2, %s25
      // Predicated region
      $region69: #{tpu_custom_call.1} parent=5 // pred_check
        %p656 = pneg %p655
      $region70: #{tpu_custom_call.1} parent=5 // pred_check_branch
        %658 = sbr.rel (%p656) target = $region72
      $region71: #{tpu_custom_call.1} parent=5 // pred_region
        %s659 = ssub.s32 %s25, 2
        // Predicated region
        $region73: #{tpu_custom_call.1} parent=71 // pred_check
          %p660 = pneg %p180
        $region74: #{tpu_custom_call.1} parent=71 // pred_check_branch
          %662 = sbr.rel (%p660) target = $region76
        $region75: #{tpu_custom_call.1} parent=71 // pred_region
          %s663 = sand.u32 %s165, 1
          %s664 = scalar_lea.sflag [#allocation4], %s663
          %s665 = sand.u32 %s165, 1
          %s666 = smul.addr %s665, 16
          %s667 = scalar_lea.vmem [#allocation10], %s666
          %669 = dma.done %s664, 256
        $region76: #{tpu_custom_call.1} parent=71 // pred_fallthru
          _
        // Predicated region
        $region77: #{tpu_custom_call.1} parent=71 // pred_check
          %p670 = pneg %p208
        $region78: #{tpu_custom_call.1} parent=71 // pred_check_branch
          %672 = sbr.rel (%p670) target = $region80
        $region79: #{tpu_custom_call.1} parent=71 // pred_region
          %s673 = sand.u32 %s31, 1
          %s674 = scalar_lea.sflag [#allocation12], %s673
          %s675 = sand.u32 %s193, 1
          %s676 = smul.addr %s675, 16
          %s677 = scalar_lea.vmem [#allocation11], %s676
          %679 = dma.done %s674, 256
        $region80: #{tpu_custom_call.1} parent=71 // pred_fallthru
          _
        // Predicated region
        $region81: #{tpu_custom_call.1} parent=71 // pred_check
          %p680 = pneg %p236
        $region82: #{tpu_custom_call.1} parent=71 // pred_check_branch
          %682 = sbr.rel (%p680) target = $region84
        $region83: #{tpu_custom_call.1} parent=71 // pred_region
          %s683 = sand.u32 %s31, 1
          %s684 = scalar_lea.sflag [#allocation12], %s683
          %s685 = sand.u32 %s221, 1
          %s686 = smul.addr %s685, 16
          %s687 = scalar_lea.vmem [#allocation13], %s686
          %689 = dma.done %s684, 256
        $region84: #{tpu_custom_call.1} parent=71 // pred_fallthru
          _
      $region72: #{tpu_custom_call.1} parent=5 // pred_fallthru
        _
    $region6: #{tpu_custom_call.1} parent=1 // loop_footer
      %s29 = sadd.s32 1, %s25
    $region7: #{tpu_custom_call.1} parent=1 // loop_footer_branch
      %24 = sbr.rel target = $region3
    $region8: #{tpu_custom_call.1} parent=1 // loop_exit
      _
    %690 = vsyncpa [#allocation3], 1
    %s691 = scalar_lea.sflag [#allocation3], 1
    %692 = vsyncpa %s691, 1
    %693 = vsyncpa [#allocation6], 1
    %694 = vsyncpa [#allocation9], 1
    %695 = vsyncpa [#allocation4], 1
    %s696 = scalar_lea.sflag [#allocation4], 1
    %697 = vsyncpa %s696, 1
    %698 = vsyncpa [#allocation12], 1
    %s699 = scalar_lea.sflag [#allocation12], 1
    %700 = vsyncpa %s699, 1

// kernel: tpu_custom_call.1
$region0: #{tpu_custom_call.1}
  #allocation0 [shape = 'u32[]', space=smem, size = 0x4, offset = 0x4, fixed_abs, tag = 'smem constant byte address 0x4 - core index']
  #allocation1 [shape = 'u32[72,128]{1,0:T(1,128)}', space=vmem, size = 0x9000, scoped, tag = 'internal scratch']
  %s0 = inlined_call_operand.hbm [shape: f32[2,64,128], index: 0, kind: input, shape index: {}]
  %s1 = inlined_call_operand.hbm [shape: f32[1,128], index: 1, kind: input, shape index: {}]
  %s2 = inlined_call_operand.hbm [shape: f32[1,128], index: 2, kind: input, shape index: {}]
  %s3 = inlined_call_operand.hbm [shape: f32[128,384], index: 3, kind: input, shape index: {}]
  %s4 = inlined_call_operand.vmem [shape: f32[1,384], index: 4, kind: input, shape index: {}]
  %s5 = inlined_call_operand.hbm [shape: f32[2,64,128], index: 5, kind: output, shape index: {0}]
  %s6 = inlined_call_operand.hbm [shape: f32[2,64,128], index: 6, kind: output, shape index: {1}]
  %s7 = inlined_call_operand.hbm [shape: f32[2,64,128], index: 7, kind: output, shape index: {2}]
  %8 = xla_tuple %s5, %s6, %s7
  %s9 = sld [smem:[#allocation0]]
  $region85: #{tpu_custom_call.1} parent=0
    _
  %s11 = ssub.s32 1, %s9
  %s12 = scalar_select 0, %s11, %s9
  $region1: #{tpu_custom_call.1} parent=0
    #allocation2 [shape = 'u8[16384]{0}', space=vmem, size = 0x4000, scoped, tag = 'input window, operand 0']
    #allocation3 [shape = 's32[2]{0}', space=sflag, size = 0x8, scoped, tag = 'scoped memory for tpu_custom_call.1']
    #allocation4 [shape = 's32[2]{0}', space=sflag, size = 0x8, scoped, tag = 'scoped memory for tpu_custom_call.1']
    #allocation5 [shape = 'u8[512]{0}', space=vmem, size = 0x400, scoped, tag = 'input window, operand 1, single buffered']
    #allocation6 [shape = 's32[1]{0}', space=sflag, size = 0x4, scoped, tag = 'scoped memory for tpu_custom_call.1']
    #allocation7 [shape = 'u8[512]{0}', space=vmem, size = 0x400, scoped, tag = 'input window, operand 2, single buffered']
    #allocation8 [shape = 'u8[196608]{0}', space=vmem, size = 0x30000, scoped, tag = 'input window, operand 3, single buffered']
    #allocation9 [shape = 's32[1]{0}', space=sflag, size = 0x4, scoped, tag = 'scoped memory for tpu_custom_call.1']
    #allocation10 [shape = 'u8[16384]{0}', space=vmem, size = 0x4000, scoped, tag = 'output window, operand 0']
    #allocation11 [shape = 'u8[16384]{0}', space=vmem, size = 0x4000, scoped, tag = 'output window, operand 1']
    #allocation12 [shape = 's32[2]{0}', space=sflag, size = 0x8, scoped, tag = 'scoped memory for tpu_custom_call.1']
    #allocation13 [shape = 'u8[16384]{0}', space=vmem, size = 0x4000, scoped, tag = 'output window, operand 2']
    %13 = vsyncpa [#allocation3], 0
    %s14 = scalar_lea.sflag [#allocation3], 1
    %15 = vsyncpa %s14, 0
    %16 = vsyncpa [#allocation6], 0
    %17 = vsyncpa [#allocation9], 0
    %18 = vsyncpa [#allocation4], 0
    %s19 = scalar_lea.sflag [#allocation4], 1
    %20 = vsyncpa %s19, 0
    %21 = vsyncpa [#allocation12], 0
    %s22 = scalar_lea.sflag [#allocation12], 1
    %23 = vsyncpa %s22, 0
    loop: start=0, step=1, limit=10
    $region2: #{tpu_custom_call.1} parent=1 // loop_pre_header
      _
    $region3: #{tpu_custom_call.1} parent=1 // loop_header
      %s25 = sphi 0, %s29
      %p26 = scmp.ge.s32.totalorder %s25, 10
      %s32 = sphi 0, %s44
      %s33 = sphi 0, %s40
      %s34 = sphi 0, %s32
      %s35 = sphi 0, %s33
      %s36 = sphi 0, %s34
      %s37 = sphi 0, %s35
      %s49 = sphi 0, %s51
      %s52 = sphi 0, %s49
      %s53 = sphi 0, %s52
      %s69 = sphi 0, %s53
      %s73 = sphi 0, %s73
      %s75 = sphi 0, %s73
      %s76 = sphi 0, %s75
      %s90 = sphi 0, %s76
      %s94 = sphi 0, %s94
      %s96 = sphi 0, %s94
      %s97 = sphi 0, %s96
      %s111 = sphi 0, %s97
      %s115 = sphi 0, %s115
      %s117 = sphi 0, %s115
      %s118 = sphi 0, %s117
      %s132 = sphi 0, %s118
      %s136 = sphi 0, %s136
      %s138 = sphi 0, %s136
      %s139 = sphi 0, %s138
      %s153 = sphi 0, %s139
      %s161 = sphi 0, %s163
      %s164 = sphi 0, %s161
      %s165 = sphi 0, %s164
      %s181 = sphi 0, %s165
      %s189 = sphi 0, %s191
      %s192 = sphi 0, %s189
      %s193 = sphi 0, %s192
      %s209 = sphi 0, %s193
      %s217 = sphi 0, %s219
      %s220 = sphi 0, %s217
      %s221 = sphi 0, %s220
      %s237 = sphi 0, %s221
    $region4: #{tpu_custom_call.1} parent=1 // loop_header_branch
      %28 = sbr.rel (%p26) target = $region8
    $region5: #{tpu_custom_call.1} parent=1 // loop_body
      %s30 = ssub.s32 %s25, 1
      %s31 = ssub.s32 %s25, 2
      %s38 = sadd.s32 1, %s33
      %p39 = scmp.ge.s32.totalorder %s38, 4
      %s40 = scalar_select %p39, 0, %s38
      %s41 = sadd.s32 1, %s32
      %s42 = scalar_select %p39, %s41, %s32
      %p43 = scmp.ge.s32.totalorder %s42, 2
      %s44 = scalar_select %p43, 0, %s42
      %s45 = ssub.s32 %s32, %s44
      %s46 = ssub.s32 %s33, %s40
      %s47 = sor.u32 %s45, %s46
      %p48 = scmp.eq.s32.totalorder %s47, 0
      %s50 = sadd.s32 %s49, 1
      %s51 = scalar_select %p48, %s49, %s50
      %p54 = pneg %p48
      %p55 = scmp.eq.s32.totalorder %s25, 7
      %p56 = por %p54, %p55
      %p57 = scmp.ne.s32.totalorder %s49, %s52
      %p58 = scmp.eq.s32.totalorder %s25, 0
      %p59 = por %p57, %p58
      %p60 = scmp.ne.s32.totalorder %s49, %s52
      %p61 = scmp.eq.s32.totalorder %s30, 7
      %p62 = por %p60, %p61
      %p63 = scmp.ne.s32.totalorder %s52, %s53
      %p64 = scmp.eq.s32.totalorder %s30, 0
      %p65 = por %p63, %p64
      %p66 = scmp.ne.s32.totalorder %s52, %s53
      %p67 = scmp.eq.s32.totalorder %s31, 7
      %p68 = por %p66, %p67
      %p70 = scmp.ne.s32.totalorder %s53, %s69
      %p71 = scmp.eq.s32.totalorder %s31, 0
      %p72 = por %p70, %p71
      %s74 = sadd.s32 %s73, 1
      %p77 = scmp.eq.s32.totalorder %s25, 7
      %p78 = scmp.ne.s32.totalorder %s73, %s75
      %p79 = scmp.eq.s32.totalorder %s25, 0
      %p80 = por %p78, %p79
      %p81 = scmp.ne.s32.totalorder %s73, %s75
      %p82 = scmp.eq.s32.totalorder %s30, 7
      %p83 = por %p81, %p82
      %p84 = scmp.ne.s32.totalorder %s75, %s76
      %p85 = scmp.eq.s32.totalorder %s30, 0
      %p86 = por %p84, %p85
      %p87 = scmp.ne.s32.totalorder %s75, %s76
      %p88 = scmp.eq.s32.totalorder %s31, 7
      %p89 = por %p87, %p88
      %p91 = scmp.ne.s32.totalorder %s76, %s90
      %p92 = scmp.eq.s32.totalorder %s31, 0
      %p93 = por %p91, %p92
      %s95 = sadd.s32 %s94, 1
      %p98 = scmp.eq.s32.totalorder %s25, 7
      %p99 = scmp.ne.s32.totalorder %s94, %s96
      %p100 = scmp.eq.s32.totalorder %s25, 0
      %p101 = por %p99, %p100
      %p102 = scmp.ne.s32.totalorder %s94, %s96
      %p103 = scmp.eq.s32.totalorder %s30, 7
      %p104 = por %p102, %p103
      %p105 = scmp.ne.s32.totalorder %s96, %s97
      %p106 = scmp.eq.s32.totalorder %s30, 0
      %p107 = por %p105, %p106
      %p108 = scmp.ne.s32.totalorder %s96, %s97
      %p109 = scmp.eq.s32.totalorder %s31, 7
      %p110 = por %p108, %p109
      %p112 = scmp.ne.s32.totalorder %s97, %s111
      %p113 = scmp.eq.s32.totalorder %s31, 0
      %p114 = por %p112, %p113
      %s116 = sadd.s32 %s115, 1
      %p119 = scmp.eq.s32.totalorder %s25, 7
      %p120 = scmp.ne.s32.totalorder %s115, %s117
      %p121 = scmp.eq.s32.totalorder %s25, 0
      %p122 = por %p120, %p121
      %p123 = scmp.ne.s32.totalorder %s115, %s117
      %p124 = scmp.eq.s32.totalorder %s30, 7
      %p125 = por %p123, %p124
      %p126 = scmp.ne.s32.totalorder %s117, %s118
      %p127 = scmp.eq.s32.totalorder %s30, 0
      %p128 = por %p126, %p127
      %p129 = scmp.ne.s32.totalorder %s117, %s118
      %p130 = scmp.eq.s32.totalorder %s31, 7
      %p131 = por %p129, %p130
      %p133 = scmp.ne.s32.totalorder %s118, %s132
      %p134 = scmp.eq.s32.totalorder %s31, 0
      %p135 = por %p133, %p134
      %s137 = sadd.s32 %s136, 1
      %p140 = scmp.eq.s32.totalorder %s25, 7
      %p141 = scmp.ne.s32.totalorder %s136, %s138
      %p142 = scmp.eq.s32.totalorder %s25, 0
      %p143 = por %p141, %p142
      %p144 = scmp.ne.s32.totalorder %s136, %s138
      %p145 = scmp.eq.s32.totalorder %s30, 7
      %p146 = por %p144, %p145
      %p147 = scmp.ne.s32.totalorder %s138, %s139
      %p148 = scmp.eq.s32.totalorder %s30, 0
      %p149 = por %p147, %p148
      %p150 = scmp.ne.s32.totalorder %s138, %s139
      %p151 = scmp.eq.s32.totalorder %s31, 7
      %p152 = por %p150, %p151
      %p154 = scmp.ne.s32.totalorder %s139, %s153
      %p155 = scmp.eq.s32.totalorder %s31, 0
      %p156 = por %p154, %p155
      %s157 = ssub.s32 %s32, %s44
      %s158 = ssub.s32 %s33, %s40
      %s159 = sor.u32 %s157, %s158
      %p160 = scmp.eq.s32.totalorder %s159, 0
      %s162 = sadd.s32 %s161, 1
      %s163 = scalar_select %p160, %s161, %s162
      %p166 = pneg %p160
      %p167 = scmp.eq.s32.totalorder %s25, 7
      %p168 = por %p166, %p167
      %p169 = scmp.ne.s32.totalorder %s161, %s164
      %p170 = scmp.eq.s32.totalorder %s25, 0
      %p171 = por %p169, %p170
      %p172 = scmp.ne.s32.totalorder %s161, %s164
      %p173 = scmp.eq.s32.totalorder %s30, 7
      %p174 = por %p172, %p173
      %p175 = scmp.ne.s32.totalorder %s164, %s165
      %p176 = scmp.eq.s32.totalorder %s30, 0
      %p177 = por %p175, %p176
      %p178 = scmp.ne.s32.totalorder %s164, %s165
      %p179 = scmp.eq.s32.totalorder %s31, 7
      %p180 = por %p178, %p179
      %p182 = scmp.ne.s32.totalorder %s165, %s181
      %p183 = scmp.eq.s32.totalorder %s31, 0
      %p184 = por %p182, %p183
      %s185 = ssub.s32 %s32, %s44
      %s186 = ssub.s32 %s33, %s40
      %s187 = sor.u32 %s185, %s186
      %p188 = scmp.eq.s32.totalorder %s187, 0
      %s190 = sadd.s32 %s189, 1
      %s191 = scalar_select %p188, %s189, %s190
      %p194 = pneg %p188
      %p195 = scmp.eq.s32.totalorder %s25, 7
      %p196 = por %p194, %p195
      %p197 = scmp.ne.s32.totalorder %s189, %s192
      %p198 = scmp.eq.s32.totalorder %s25, 0
      %p199 = por %p197, %p198
      %p200 = scmp.ne.s32.totalorder %s189, %s192
      %p201 = scmp.eq.s32.totalorder %s30, 7
      %p202 = por %p200, %p201
      %p203 = scmp.ne.s32.totalorder %s192, %s193
      %p204 = scmp.eq.s32.totalorder %s30, 0
      %p205 = por %p203, %p204
      %p206 = scmp.ne.s32.totalorder %s192, %s193
      %p207 = scmp.eq.s32.totalorder %s31, 7
      %p208 = por %p206, %p207
      %p210 = scmp.ne.s32.totalorder %s193, %s209
      %p211 = scmp.eq.s32.totalorder %s31, 0
      %p212 = por %p210, %p211
      %s213 = ssub.s32 %s32, %s44
      %s214 = ssub.s32 %s33, %s40
      %s215 = sor.u32 %s213, %s214
      %p216 = scmp.eq.s32.totalorder %s215, 0
      %s218 = sadd.s32 %s217, 1
      %s219 = scalar_select %p216, %s217, %s218
      %p222 = pneg %p216
      %p223 = scmp.eq.s32.totalorder %s25, 7
      %p224 = por %p222, %p223
      %p225 = scmp.ne.s32.totalorder %s217, %s220
      %p226 = scmp.eq.s32.totalorder %s25, 0
      %p227 = por %p225, %p226
      %p228 = scmp.ne.s32.totalorder %s217, %s220
      %p229 = scmp.eq.s32.totalorder %s30, 7
      %p230 = por %p228, %p229
      %p231 = scmp.ne.s32.totalorder %s220, %s221
      %p232 = scmp.eq.s32.totalorder %s30, 0
      %p233 = por %p231, %p232
      %p234 = scmp.ne.s32.totalorder %s220, %s221
      %p235 = scmp.eq.s32.totalorder %s31, 7
      %p236 = por %p234, %p235
      %p238 = scmp.ne.s32.totalorder %s221, %s237
      %p239 = scmp.eq.s32.totalorder %s31, 0
      %p240 = por %p238, %p239
      %p241 = scmp.le.s32.totalorder 1, %s25
      %p242 = scmp.lt.s32.totalorder %s25, 9
      %p243 = pnand %p241, %p242
      %p244 = pneg %p243
      // Predicated region
      $region9: #{tpu_custom_call.1} parent=5 // pred_check
        _
      $region10: #{tpu_custom_call.1} parent=5 // pred_check_branch
        %246 = sbr.rel (%p243) target = $region12
      $region11: #{tpu_custom_call.1} parent=5 // pred_region
        %s247 = ssub.s32 %s25, 1
        // Predicated region
        $region13: #{tpu_custom_call.1} parent=11 // pred_check
          %p248 = pneg %p86
        $region14: #{tpu_custom_call.1} parent=11 // pred_check_branch
          %250 = sbr.rel (%p248) target = $region16
        $region15: #{tpu_custom_call.1} parent=11 // pred_region
          %252 = vsyncadd [#allocation6], 0
          %s254 = sshll.u32 %s1, 4
          %s255 = int_to_ptr.hbm [resolvable:$true] %s254
          %s256 = sshll.u32 [#allocation5], 4
          %s257 = int_to_ptr.vmem [resolvable:$true] %s256
          %259 = dma.hbm_to_vmem [thread:$0]  %s255, 16, %s257, [#allocation6]
        $region16: #{tpu_custom_call.1} parent=11 // pred_fallthru
          _
        // Predicated region
        $region17: #{tpu_custom_call.1} parent=11 // pred_check
          %p260 = pneg %p107
        $region18: #{tpu_custom_call.1} parent=11 // pred_check_branch
          %262 = sbr.rel (%p260) target = $region20
        $region19: #{tpu_custom_call.1} parent=11 // pred_region
          %264 = vsyncadd [#allocation6], 0
          %s266 = sshll.u32 %s2, 4
          %s267 = int_to_ptr.hbm [resolvable:$true] %s266
          %s268 = sshll.u32 [#allocation7], 4
          %s269 = int_to_ptr.vmem [resolvable:$true] %s268
          %271 = dma.hbm_to_vmem [thread:$0]  %s267, 16, %s269, [#allocation6]
        $region20: #{tpu_custom_call.1} parent=11 // pred_fallthru
          _
        // Predicated region
        $region21: #{tpu_custom_call.1} parent=11 // pred_check
          %p272 = pneg %p128
        $region22: #{tpu_custom_call.1} parent=11 // pred_check_branch
          %274 = sbr.rel (%p272) target = $region24
        $region23: #{tpu_custom_call.1} parent=11 // pred_region
          %276 = vsyncadd [#allocation9], 0
          %s277 = sshll.u32 %s3, 4
          %s278 = int_to_ptr.hbm [resolvable:$true] %s277
          %s279 = sshll.u32 [#allocation8], 4
          %s280 = int_to_ptr.vmem [resolvable:$true] %s279
          %285 = dma.hbm_to_vmem [thread:$0]  %s278, 6144, %s280, [#allocation9], 384, 384, 24
        $region24: #{tpu_custom_call.1} parent=11 // pred_fallthru
          _
        // Predicated region
        $region25: #{tpu_custom_call.1} parent=11 // pred_check
          %p286 = pneg %p149
        $region26: #{tpu_custom_call.1} parent=11 // pred_check_branch
          %288 = sbr.rel (%p286) target = $region28
        $region27: #{tpu_custom_call.1} parent=11 // pred_region
          _
        $region28: #{tpu_custom_call.1} parent=11 // pred_fallthru
          _
      $region12: #{tpu_custom_call.1} parent=5 // pred_fallthru
        _
      %p289 = scmp.lt.s32.totalorder %s25, 8
      // Predicated region
      $region29: #{tpu_custom_call.1} parent=5 // pred_check
        %p290 = pneg %p289
      $region30: #{tpu_custom_call.1} parent=5 // pred_check_branch
        %292 = sbr.rel (%p290) target = $region32
      $region31: #{tpu_custom_call.1} parent=5 // pred_region
        // Predicated region
        $region33: #{tpu_custom_call.1} parent=31 // pred_check
          %p293 = pneg %p59
        $region34: #{tpu_custom_call.1} parent=31 // pred_check_branch
          %295 = sbr.rel (%p293) target = $region36
        $region35: #{tpu_custom_call.1} parent=31 // pred_region
          %s296 = sand.u32 %s49, 1
          %s297 = scalar_lea.sflag [#allocation3], %s296
          %s298 = sand.u32 %s49, 1
          %s299 = smul.addr %s298, 16
          %s300 = scalar_lea.vmem [#allocation2], %s299
          %s301 = smul.u32 2, %s33
          %303 = vsyncadd %s297, 0
          %s304 = smul.addr %s32, 8
          %s305 = sadd.s32 %s301, %s304
          %s306 = smul.addr %s305, 8
          %s307 = scalar_lea.hbm %s0, %s306
          %s308 = sshll.u32 %s307, 4
          %s309 = int_to_ptr.hbm [resolvable:$true] %s308
          %s310 = sshll.u32 %s300, 4
          %s311 = int_to_ptr.vmem [resolvable:$true] %s310
          %316 = dma.hbm_to_vmem [thread:$0]  %s309, 256, %s311, %s297, 128, 128, 8
        $region36: #{tpu_custom_call.1} parent=31 // pred_fallthru
          _
      $region32: #{tpu_custom_call.1} parent=5 // pred_fallthru
        _
      %p317 = scmp.le.s32.totalorder 1, %s25
      %p318 = scmp.lt.s32.totalorder %s25, 9
      %p319 = pnand %p317, %p318
      %p320 = pneg %p319
      // Predicated region
      $region37: #{tpu_custom_call.1} parent=5 // pred_check
        _
      $region38: #{tpu_custom_call.1} parent=5 // pred_check_branch
        %322 = sbr.rel (%p319) target = $region40
      $region39: #{tpu_custom_call.1} parent=5 // pred_region
        %s323 = ssub.s32 %s25, 1
        %s324 = sand.u32 %s52, 1
        %s325 = scalar_lea.sflag [#allocation3], %s324
        %s326 = sand.u32 %s52, 1
        %s327 = smul.addr %s326, 16
        %s328 = scalar_lea.vmem [#allocation2], %s327
        // Predicated region
        $region41: #{tpu_custom_call.1} parent=39 // pred_check
          %p329 = pneg %p65
        $region42: #{tpu_custom_call.1} parent=39 // pred_check_branch
          %331 = sbr.rel (%p329) target = $region44
        $region43: #{tpu_custom_call.1} parent=39 // pred_region
          %333 = dma.done %s325, 256
        $region44: #{tpu_custom_call.1} parent=39 // pred_fallthru
          _
        // Predicated region
        $region45: #{tpu_custom_call.1} parent=39 // pred_check
          %p334 = pneg %p86
        $region46: #{tpu_custom_call.1} parent=39 // pred_check_branch
          %336 = sbr.rel (%p334) target = $region48
        $region47: #{tpu_custom_call.1} parent=39 // pred_region
          %338 = dma.done [#allocation6], 16
        $region48: #{tpu_custom_call.1} parent=39 // pred_fallthru
          _
        // Predicated region
        $region49: #{tpu_custom_call.1} parent=39 // pred_check
          %p339 = pneg %p107
        $region50: #{tpu_custom_call.1} parent=39 // pred_check_branch
          %341 = sbr.rel (%p339) target = $region52
        $region51: #{tpu_custom_call.1} parent=39 // pred_region
          %343 = dma.done [#allocation6], 16
        $region52: #{tpu_custom_call.1} parent=39 // pred_fallthru
          _
        // Predicated region
        $region53: #{tpu_custom_call.1} parent=39 // pred_check
          %p344 = pneg %p128
        $region54: #{tpu_custom_call.1} parent=39 // pred_check_branch
          %346 = sbr.rel (%p344) target = $region56
        $region55: #{tpu_custom_call.1} parent=39 // pred_region
          %348 = dma.done [#allocation9], 6144
        $region56: #{tpu_custom_call.1} parent=39 // pred_fallthru
          _
        %s349 = sand.u32 %s52, 1
        %s350 = scalar_lea.sflag [#allocation3], %s349
        %s351 = sand.u32 %s52, 1
        %s352 = smul.addr %s351, 16
        %s353 = scalar_lea.vmem [#allocation2], %s352
        %p354 = pneg %p65
        %p355 = pneg %p62
        %p356 = pneg %p86
        %p357 = pneg %p83
        %p358 = pneg %p107
        %p359 = pneg %p104
        %p360 = pneg %p128
        %p361 = pneg %p125
        %p362 = pneg %p149
        %p363 = pneg %p146
        %p364 = pneg %p177
        %p365 = pneg %p174
        %s366 = sand.u32 %s164, 1
        %s367 = scalar_lea.sflag [#allocation4], %s366
        %s368 = sand.u32 %s164, 1
        %s369 = smul.addr %s368, 16
        %s370 = scalar_lea.vmem [#allocation10], %s369
        %p371 = pneg %p205
        %p372 = pneg %p202
        %s373 = sand.u32 %s30, 1
        %s374 = scalar_lea.sflag [#allocation12], %s373
        %s375 = sand.u32 %s192, 1
        %s376 = smul.addr %s375, 16
        %s377 = scalar_lea.vmem [#allocation11], %s376
        %p378 = pneg %p233
        %p379 = pneg %p230
        %s380 = sand.u32 %s30, 1
        %s381 = scalar_lea.sflag [#allocation12], %s380
        %s382 = sand.u32 %s220, 1
        %s383 = smul.addr %s382, 16
        %s384 = scalar_lea.vmem [#allocation13], %s383
        %s385 = smul.u32 2, %s35
        %s386 = smul.u32 2, %s35
        %s387 = smul.u32 2, %s35
        %s388 = smul.u32 2, %s35
        %v389 = vld [vmem:[%s328] sm:$0xff]
        %v390 = vld [vmem:[%s328 + $0x8] sm:$0xff]
        %v391 = vld [vmem:[#allocation5] sm:$0x1]
        %v392 = vld [vmem:[#allocation7] sm:$0x1]
        %393 = vadd.xlane.f32.xlu0 %v389
        %v394 = vpop.xlane.xlu0 %393
        %395 = vadd.xlane.f32.xlu0 %v390
        %v396 = vpop.xlane.xlu0 %395
        %v397 = vrcp.pop 128.0
        %v398 = vmul.f32 128.0, %v397
        %v399 = vsub.f32 1.0, %v398
        %v400 = vmul.f32 %v397, %v399
        %v401 = vadd.f32 %v397, %v400
        %vm402 = vweird.f32 %v397
        %v403 = vsel %vm402, %v397, %v401
        %v404 = vmul.f32 %v394, %v403
        %v405 = vmul.f32 %v396, %v403
        %v406 = vsub.f32 %v389, %v404
        %v407 = vsub.f32 %v390, %v405
        %v408 = vmul.f32 %v406, %v406
        %v409 = vmul.f32 %v407, %v407
        %410 = vadd.xlane.f32.xlu0 %v408
        %v411 = vpop.xlane.xlu0 %410
        %412 = vadd.xlane.f32.xlu0 %v409
        %v413 = vpop.xlane.xlu0 %412
        %v414 = vmul.f32 %v411, %v403
        %v415 = vmul.f32 %v413, %v403
        %v416 = vadd.f32 %v414, 1e-05
        %v417 = vadd.f32 %v415, 1e-05
        %v418 = vrsqrt.pop %v416
        %v419 = vmul.f32 %v418, %v416
        %v420 = vmul.f32 %v419, %v418
        %v421 = vmul.f32 0.5, %v420
        %v422 = vsub.f32 1.5, %v421
        %v423 = vmul.f32 %v418, %v422
        %vm424 = vweird.f32 %v416
        %vm425 = vweird.f32 %v418
        %vm426 = vmor %vm424, %vm425
        %v427 = vsel %vm426, %v418, %v423
        %v428 = vrsqrt.pop %v417
        %v429 = vmul.f32 %v428, %v417
        %v430 = vmul.f32 %v429, %v428
        %v431 = vmul.f32 0.5, %v430
        %v432 = vsub.f32 1.5, %v431
        %v433 = vmul.f32 %v428, %v432
        %vm434 = vweird.f32 %v417
        %vm435 = vweird.f32 %v428
        %vm436 = vmor %vm434, %vm435
        %v437 = vsel %vm436, %v428, %v433
        %v438 = vmul.f32 %v406, %v427
        %v439 = vmul.f32 %v407, %v437
        %v441 = vperm.slane %v391, 0
        %v443 = vmul.f32 %v438, %v441
        %v444 = vmul.f32 %v439, %v441
        %v446 = vperm.slane %v392, 0
        %v448 = vadd.f32 %v443, %v446
        %v449 = vadd.f32 %v444, %v446
        %v450 = vld [vmem:[#allocation8] sm:$0xff]
        %v451 = vld [vmem:[#allocation8 + $0x8] sm:$0xff]
        %v452 = vld [vmem:[#allocation8 + $0x10] sm:$0xff]
        %v453 = vld [vmem:[#allocation8 + $0x18] sm:$0xff]
        %v454 = vld [vmem:[#allocation8 + $0x20] sm:$0xff]
        %v455 = vld [vmem:[#allocation8 + $0x28] sm:$0xff]
        %v456 = vld [vmem:[#allocation8 + $0x30] sm:$0xff]
        %v457 = vld [vmem:[#allocation8 + $0x38] sm:$0xff]
        %v458 = vld [vmem:[#allocation8 + $0x40] sm:$0xff]
        %v459 = vld [vmem:[#allocation8 + $0x48] sm:$0xff]
        %v460 = vld [vmem:[#allocation8 + $0x50] sm:$0xff]
        %v461 = vld [vmem:[#allocation8 + $0x58] sm:$0xff]
        %v462 = vld [vmem:[#allocation8 + $0x60] sm:$0xff]
        %v463 = vld [vmem:[#allocation8 + $0x68] sm:$0xff]
        %v464 = vld [vmem:[#allocation8 + $0x70] sm:$0xff]
        %v465 = vld [vmem:[#allocation8 + $0x78] sm:$0xff]
        %v466 = vld [vmem:[#allocation8 + $0x80] sm:$0xff]
        %v467 = vld [vmem:[#allocation8 + $0x88] sm:$0xff]
        %v468 = vld [vmem:[#allocation8 + $0x90] sm:$0xff]
        %v469 = vld [vmem:[#allocation8 + $0x98] sm:$0xff]
        %v470 = vld [vmem:[#allocation8 + $0xa0] sm:$0xff]
        %v471 = vld [vmem:[#allocation8 + $0xa8] sm:$0xff]
        %v472 = vld [vmem:[#allocation8 + $0xb0] sm:$0xff]
        %v473 = vld [vmem:[#allocation8 + $0xb8] sm:$0xff]
        %v474 = vld [vmem:[#allocation8 + $0xc0] sm:$0xff]
        %v475 = vld [vmem:[#allocation8 + $0xc8] sm:$0xff]
        %v476 = vld [vmem:[#allocation8 + $0xd0] sm:$0xff]
        %v477 = vld [vmem:[#allocation8 + $0xd8] sm:$0xff]
        %v478 = vld [vmem:[#allocation8 + $0xe0] sm:$0xff]
        %v479 = vld [vmem:[#allocation8 + $0xe8] sm:$0xff]
        %v480 = vld [vmem:[#allocation8 + $0xf0] sm:$0xff]
        %v481 = vld [vmem:[#allocation8 + $0xf8] sm:$0xff]
        %v482 = vld [vmem:[#allocation8 + $0x100] sm:$0xff]
        %v483 = vld [vmem:[#allocation8 + $0x108] sm:$0xff]
        %v484 = vld [vmem:[#allocation8 + $0x110] sm:$0xff]
        %v485 = vld [vmem:[#allocation8 + $0x118] sm:$0xff]
        %v486 = vld [vmem:[#allocation8 + $0x120] sm:$0xff]
        %v487 = vld [vmem:[#allocation8 + $0x128] sm:$0xff]
        %v488 = vld [vmem:[#allocation8 + $0x130] sm:$0xff]
        %v489 = vld [vmem:[#allocation8 + $0x138] sm:$0xff]
        %v490 = vld [vmem:[#allocation8 + $0x140] sm:$0xff]
        %v491 = vld [vmem:[#allocation8 + $0x148] sm:$0xff]
        %v492 = vld [vmem:[#allocation8 + $0x150] sm:$0xff]
        %v493 = vld [vmem:[#allocation8 + $0x158] sm:$0xff]
        %v494 = vld [vmem:[#allocation8 + $0x160] sm:$0xff]
        %v495 = vld [vmem:[#allocation8 + $0x168] sm:$0xff]
        %v496 = vld [vmem:[#allocation8 + $0x170] sm:$0xff]
        %v497 = vld [vmem:[#allocation8 + $0x178] sm:$0xff]
        %v498 = vld [vmem:[%s4] sm:$0x7]
        %v500 = vperm.slane %v498, 0
        %v501 = vperm.slane %v498, 1
        %v502 = vperm.slane %v498, 2
        %506 = vmatpush.msra.mxu0 %v495
        %507 = vmatpush.msra.mxu0 %v492
        %508 = vmatpush.msra.mxu0 %v489
        %509 = vmatpush.msra.mxu0 %v486
        %510 = vmatpush.msra.mxu0 %v483
        %511 = vmatpush.msra.mxu0 %v480
        %512 = vmatpush.msra.mxu0 %v477
        %513 = vmatpush.msra.mxu0 %v474
        %514 = vmatpush.msra.mxu0 %v471
        %515 = vmatpush.msra.mxu0 %v468
        %516 = vmatpush.msra.mxu0 %v465
        %517 = vmatpush.msra.mxu0 %v462
        %518 = vmatpush.msra.mxu0 %v459
        %519 = vmatpush.msra.mxu0 %v456
        %520 = vmatpush.msra.mxu0 %v453
        %521 = vmatpush.msra.mxu0 %v450
        %522 = vmatmul.f32.gmra.mxu0 %v448
        %v523 = vpop.f32.mrf.mxu0
        %v524 = vadd.f32 %v500, %v523
        %525 = vmatmul.f32.gmra.mxu0 %v449
        %v526 = vpop.f32.mrf.mxu0
        %v527 = vadd.f32 %v500, %v526
        %528 = vdwg.mxu0
        %529 = vmatpush.msra.mxu0 %v496
        %530 = vmatpush.msra.mxu0 %v493
        %531 = vmatpush.msra.mxu0 %v490
        %532 = vmatpush.msra.mxu0 %v487
        %533 = vmatpush.msra.mxu0 %v484
        %534 = vmatpush.msra.mxu0 %v481
        %535 = vmatpush.msra.mxu0 %v478
        %536 = vmatpush.msra.mxu0 %v475
        %537 = vmatpush.msra.mxu0 %v472
        %538 = vmatpush.msra.mxu0 %v469
        %539 = vmatpush.msra.mxu0 %v466
        %540 = vmatpush.msra.mxu0 %v463
        %541 = vmatpush.msra.mxu0 %v460
        %542 = vmatpush.msra.mxu0 %v457
        %543 = vmatpush.msra.mxu0 %v454
        %544 = vmatpush.msra.mxu0 %v451
        %545 = vmatmul.f32.gmra.mxu0 %v448
        %v546 = vpop.f32.mrf.mxu0
        %v547 = vadd.f32 %v501, %v546
        %548 = vmatmul.f32.gmra.mxu0 %v449
        %v549 = vpop.f32.mrf.mxu0
        %v550 = vadd.f32 %v501, %v549
        %551 = vdwg.mxu0
        %552 = vmatpush.msra.mxu0 %v497
        %553 = vmatpush.msra.mxu0 %v494
        %554 = vmatpush.msra.mxu0 %v491
        %555 = vmatpush.msra.mxu0 %v488
        %556 = vmatpush.msra.mxu0 %v485
        %557 = vmatpush.msra.mxu0 %v482
        %558 = vmatpush.msra.mxu0 %v479
        %559 = vmatpush.msra.mxu0 %v476
        %560 = vmatpush.msra.mxu0 %v473
        %561 = vmatpush.msra.mxu0 %v470
        %562 = vmatpush.msra.mxu0 %v467
        %563 = vmatpush.msra.mxu0 %v464
        %564 = vmatpush.msra.mxu0 %v461
        %565 = vmatpush.msra.mxu0 %v458
        %566 = vmatpush.msra.mxu0 %v455
        %567 = vmatpush.msra.mxu0 %v452
        %568 = vmatmul.f32.gmra.mxu0 %v448
        %v569 = vpop.f32.mrf.mxu0
        %v570 = vadd.f32 %v502, %v569
        %571 = vmatmul.f32.gmra.mxu0 %v449
        %v572 = vpop.f32.mrf.mxu0
        %v573 = vadd.f32 %v502, %v572
        %574 = vdwg.mxu0
        %v575 = vmul.f32 %v524, 0.17677669
        %v576 = vmul.f32 %v527, 0.17677669
        %577 = vst [vmem:[%s370] sm:$0xff] %v575
        %578 = vst [vmem:[%s370 + $0x8] sm:$0xff] %v576
        %579 = vst [vmem:[%s377] sm:$0xff] %v547
        %580 = vst [vmem:[%s377 + $0x8] sm:$0xff] %v550
        %581 = vst [vmem:[%s384] sm:$0xff] %v570
        %582 = vst [vmem:[%s384 + $0x8] sm:$0xff] %v573
        %s583 = sand.u32 %s164, 1
        %s584 = scalar_lea.sflag [#allocation4], %s583
        %s585 = sand.u32 %s164, 1
        %s586 = smul.addr %s585, 16
        %s587 = scalar_lea.vmem [#allocation10], %s586
        %s588 = sand.u32 %s30, 1
        %s589 = scalar_lea.sflag [#allocation12], %s588
        %s590 = sand.u32 %s192, 1
        %s591 = smul.addr %s590, 16
        %s592 = scalar_lea.vmem [#allocation11], %s591
        %s593 = sand.u32 %s30, 1
        %s594 = scalar_lea.sflag [#allocation12], %s593
        %s595 = sand.u32 %s220, 1
        %s596 = smul.addr %s595, 16
        %s597 = scalar_lea.vmem [#allocation13], %s596
        // Predicated region
        $region57: #{tpu_custom_call.1} parent=39 // pred_check
          %p598 = pneg %p174
        $region58: #{tpu_custom_call.1} parent=39 // pred_check_branch
          %600 = sbr.rel (%p598) target = $region60
        $region59: #{tpu_custom_call.1} parent=39 // pred_region
          %s601 = smul.u32 2, %s35
          %603 = vsyncadd %s584, 0
          %s604 = smul.addr %s34, 8
          %s605 = sadd.s32 %s601, %s604
          %s606 = smul.addr %s605, 8
          %s607 = scalar_lea.hbm %s5, %s606
          %s608 = sshll.u32 %s587, 4
          %s609 = int_to_ptr.vmem [resolvable:$true] %s608
          %s610 = sshll.u32 %s607, 4
          %s611 = int_to_ptr.hbm [resolvable:$true] %s610
          %616 = dma.vmem_to_hbm [thread:$0]  %s609, 256, %s611, %s584, 128, 128, 8
        $region60: #{tpu_custom_call.1} parent=39 // pred_fallthru
          _
        // Predicated region
        $region61: #{tpu_custom_call.1} parent=39 // pred_check
          %p617 = pneg %p202
        $region62: #{tpu_custom_call.1} parent=39 // pred_check_branch
          %619 = sbr.rel (%p617) target = $region64
        $region63: #{tpu_custom_call.1} parent=39 // pred_region
          %s620 = smul.u32 2, %s35
          %622 = vsyncadd %s589, 0
          %s623 = smul.addr %s34, 8
          %s624 = sadd.s32 %s620, %s623
          %s625 = smul.addr %s624, 8
          %s626 = scalar_lea.hbm %s6, %s625
          %s627 = sshll.u32 %s592, 4
          %s628 = int_to_ptr.vmem [resolvable:$true] %s627
          %s629 = sshll.u32 %s626, 4
          %s630 = int_to_ptr.hbm [resolvable:$true] %s629
          %635 = dma.vmem_to_hbm [thread:$0]  %s628, 256, %s630, %s589, 128, 128, 8
        $region64: #{tpu_custom_call.1} parent=39 // pred_fallthru
          _
        // Predicated region
        $region65: #{tpu_custom_call.1} parent=39 // pred_check
          %p636 = pneg %p230
        $region66: #{tpu_custom_call.1} parent=39 // pred_check_branch
          %638 = sbr.rel (%p636) target = $region68
        $region67: #{tpu_custom_call.1} parent=39 // pred_region
          %s639 = smul.u32 2, %s35
          %641 = vsyncadd %s594, 0
          %s642 = smul.addr %s34, 8
          %s643 = sadd.s32 %s639, %s642
          %s644 = smul.addr %s643, 8
          %s645 = scalar_lea.hbm %s7, %s644
          %s646 = sshll.u32 %s597, 4
          %s647 = int_to_ptr.vmem [resolvable:$true] %s646
          %s648 = sshll.u32 %s645, 4
          %s649 = int_to_ptr.hbm [resolvable:$true] %s648
          %654 = dma.vmem_to_hbm [thread:$0]  %s647, 256, %s649, %s594, 128, 128, 8
        $region68: #{tpu_custom_call.1} parent=39 // pred_fallthru
          _
      $region40: #{tpu_custom_call.1} parent=5 // pred_fallthru
        _
      %p655 = scmp.le.s32.totalorder 2, %s25
      // Predicated region
      $region69: #{tpu_custom_call.1} parent=5 // pred_check
        %p656 = pneg %p655
      $region70: #{tpu_custom_call.1} parent=5 // pred_check_branch
        %658 = sbr.rel (%p656) target = $region72
      $region71: #{tpu_custom_call.1} parent=5 // pred_region
        %s659 = ssub.s32 %s25, 2
        // Predicated region
        $region73: #{tpu_custom_call.1} parent=71 // pred_check
          %p660 = pneg %p180
        $region74: #{tpu_custom_call.1} parent=71 // pred_check_branch
          %662 = sbr.rel (%p660) target = $region76
        $region75: #{tpu_custom_call.1} parent=71 // pred_region
          %s663 = sand.u32 %s165, 1
          %s664 = scalar_lea.sflag [#allocation4], %s663
          %s665 = sand.u32 %s165, 1
          %s666 = smul.addr %s665, 16
          %s667 = scalar_lea.vmem [#allocation10], %s666
          %669 = dma.done %s664, 256
        $region76: #{tpu_custom_call.1} parent=71 // pred_fallthru
          _
        // Predicated region
        $region77: #{tpu_custom_call.1} parent=71 // pred_check
          %p670 = pneg %p208
        $region78: #{tpu_custom_call.1} parent=71 // pred_check_branch
          %672 = sbr.rel (%p670) target = $region80
        $region79: #{tpu_custom_call.1} parent=71 // pred_region
          %s673 = sand.u32 %s31, 1
          %s674 = scalar_lea.sflag [#allocation12], %s673
          %s675 = sand.u32 %s193, 1
          %s676 = smul.addr %s675, 16
          %s677 = scalar_lea.vmem [#allocation11], %s676
          %679 = dma.done %s674, 256
        $region80: #{tpu_custom_call.1} parent=71 // pred_fallthru
          _
        // Predicated region
        $region81: #{tpu_custom_call.1} parent=71 // pred_check
          %p680 = pneg %p236
        $region82: #{tpu_custom_call.1} parent=71 // pred_check_branch
          %682 = sbr.rel (%p680) target = $region84
        $region83: #{tpu_custom_call.1} parent=71 // pred_region
          %s683 = sand.u32 %s31, 1
          %s684 = scalar_lea.sflag [#allocation12], %s683
          %s685 = sand.u32 %s221, 1
          %s686 = smul.addr %s685, 16
          %s687 = scalar_lea.vmem [#allocation13], %s686
          %689 = dma.done %s684, 256
        $region84: #{tpu_custom_call.1} parent=71 // pred_fallthru
          _
      $region72: #{tpu_custom_call.1} parent=5 // pred_fallthru
        _
    $region6: #{tpu_custom_call.1} parent=1 // loop_footer
      %s29 = sadd.s32 1, %s25
    $region7: #{tpu_custom_call.1} parent=1 // loop_footer_branch
      %24 = sbr.rel target = $region3
    $region8: #{tpu_custom_call.1} parent=1 // loop_exit
      _
    %690 = vsyncpa [#allocation3], 1
    %s691 = scalar_lea.sflag [#allocation3], 1
    %692 = vsyncpa %s691, 1
    %693 = vsyncpa [#allocation6], 1
    %694 = vsyncpa [#allocation9], 1
    %695 = vsyncpa [#allocation4], 1
    %s696 = scalar_lea.sflag [#allocation4], 1
    %697 = vsyncpa %s696, 1
    %698 = vsyncpa [#allocation12], 1
    %s699 = scalar_lea.sflag [#allocation12], 1
    %700 = vsyncpa %s699, 1

</llo_original>
